<compile_context>
chip_gen: v7x
topology: tpu7x:2x2x1
jax: 0.10.0
libtpu: 0.0.40
codegen_flags: <defaults>
</compile_context>

<pallas_src>
from functools import partial

import jax
import jax.numpy as jnp
from jax.experimental import pallas as pl
from jax.experimental.pallas import tpu as pltpu


# ----------------------------------------------------------------------------------
# Kernel 1: fused global-average-pool + SE MLP (conv1 -> ReLU -> [conv_a2l|conv_a2g]
#           -> sigmoid), producing the per-channel gates for both branches.
# grid = (N, HW_tiles); spatial tiles are the reduction axis.
# ----------------------------------------------------------------------------------
def _pool_gate_kernel(xl_ref, xg_ref, w1_ref, b1_ref, w2_ref, b2_ref,
                      gl_ref, gg_ref, acc_l_ref, acc_g_ref, *, inv_hw):
    t = pl.program_id(1)

    @pl.when(t == 0)
    def _init():
        acc_l_ref[...] = jnp.zeros_like(acc_l_ref)
        acc_g_ref[...] = jnp.zeros_like(acc_g_ref)

    # Partial per-channel sums of this spatial tile (accumulate in f32).
    acc_l_ref[...] += jnp.sum(xl_ref[0].astype(jnp.float32), axis=0, keepdims=True)
    acc_g_ref[...] += jnp.sum(xg_ref[0].astype(jnp.float32), axis=0, keepdims=True)

    @pl.when(t == pl.num_programs(1) - 1)
    def _finalize():
        # avgpool result, ordered [local channels | global channels] as in torch.cat.
        pooled = jnp.concatenate([acc_l_ref[...], acc_g_ref[...]], axis=-1) * inv_hw
        # conv1 (1x1) + bias + ReLU
        h = jnp.dot(pooled, w1_ref[...], preferred_element_type=jnp.float32)
        h = jnp.maximum(h + b1_ref[...], 0.0)
        # conv_a2l and conv_a2g fused into one matmul + bias + sigmoid
        g = jnp.dot(h, w2_ref[...], preferred_element_type=jnp.float32)
        g = jax.nn.sigmoid(g + b2_ref[...])
        c_l = gl_ref.shape[-1]
        gl_ref[...] = g[:, :c_l].reshape(gl_ref.shape)
        gg_ref[...] = g[:, c_l:].reshape(gg_ref.shape)


# ----------------------------------------------------------------------------------
# Kernel 2: per-channel gating of both branches (x_l = id_l * gate_l, x_g = id_g * gate_g).
# grid = (N, HW_tiles); both axes parallel.
# ----------------------------------------------------------------------------------
def _scale_kernel(xl_ref, xg_ref, gl_ref, gg_ref, ol_ref, og_ref):
    ol_ref[...] = (xl_ref[...] * gl_ref[...]).astype(ol_ref.dtype)
    og_ref[...] = (xg_ref[...] * gg_ref[...]).astype(og_ref.dtype)


# ----------------------------------------------------------------------------------
# Wrappers
# ----------------------------------------------------------------------------------
def _pick_hw_tile(hw, target=1024):
    """Largest spatial-tile length that divides hw, is a multiple of 8, and <= target."""
    if hw <= target:
        return hw
    best = 0
    t = 8
    while t <= target:
        if hw % t == 0:
            best = t
        t += 8
    return best if best else hw


def ffcse_forward(id_l, id_g, params):
    """FFCSE_block forward. id_l: (N,H,W,C_l), id_g: (N,H,W,C_g), NHWC float."""
    n, h, w, c_l = id_l.shape
    ng, hg, wg, c_g = id_g.shape
    assert (n, h, w) == (ng, hg, wg)
    assert c_l > 0 and c_g > 0
    c = c_l + c_g
    hidden = params["w1"].shape[1]
    hw = h * w
    thw = _pick_hw_tile(hw)
    n_t = hw // thw

    xl = id_l.reshape(n, hw, c_l)
    xg = id_g.reshape(n, hw, c_g)

    # ---- Kernel 1: pooled means + fused SE MLP -> gates -------------------------
    gate_l, gate_g = pl.pallas_call(
        partial(_pool_gate_kernel, inv_hw=1.0 / float(hw)),
        out_shape=(jax.ShapeDtypeStruct((n, 1, c_l), jnp.float32),
                   jax.ShapeDtypeStruct((n, 1, c_g), jnp.float32)),
        grid_spec=pltpu.PrefetchScalarGridSpec(
            num_scalar_prefetch=0,
            grid=(n, n_t),
            in_specs=[
                pl.BlockSpec((1, thw, c_l), lambda b, t: (b, t, 0)),
                pl.BlockSpec((1, thw, c_g), lambda b, t: (b, t, 0)),
                pl.BlockSpec((c, hidden), lambda b, t: (0, 0)),
                pl.BlockSpec((1, hidden), lambda b, t: (0, 0)),
                pl.BlockSpec((hidden, c), lambda b, t: (0, 0)),
                pl.BlockSpec((1, c), lambda b, t: (0, 0)),
            ],
            out_specs=(pl.BlockSpec((1, 1, c_l), lambda b, t: (b, 0, 0)),
                       pl.BlockSpec((1, 1, c_g), lambda b, t: (b, 0, 0))),
            scratch_shapes=[pltpu.VMEM((1, c_l), jnp.float32),
                            pltpu.VMEM((1, c_g), jnp.float32)],
        ),
        compiler_params=pltpu.CompilerParams(
            dimension_semantics=("parallel", "arbitrary")),
    )(xl, xg, params["w1"], params["b1"], params["w2"], params["b2"])

    # ---- Kernel 2: broadcast gating over the spatial map -------------------------
    out_l, out_g = pl.pallas_call(
        _scale_kernel,
        out_shape=(jax.ShapeDtypeStruct((n, hw, c_l), id_l.dtype),
                   jax.ShapeDtypeStruct((n, hw, c_g), id_g.dtype)),
        grid_spec=pltpu.PrefetchScalarGridSpec(
            num_scalar_prefetch=0,
            grid=(n, n_t),
            in_specs=[
                pl.BlockSpec((1, thw, c_l), lambda b, t: (b, t, 0)),
                pl.BlockSpec((1, thw, c_g), lambda b, t: (b, t, 0)),
                pl.BlockSpec((1, 1, c_l), lambda b, t: (b, 0, 0)),
                pl.BlockSpec((1, 1, c_g), lambda b, t: (b, 0, 0)),
            ],
            out_specs=(pl.BlockSpec((1, thw, c_l), lambda b, t: (b, t, 0)),
                       pl.BlockSpec((1, thw, c_g), lambda b, t: (b, t, 0))),
        ),
        compiler_params=pltpu.CompilerParams(
            dimension_semantics=("parallel", "parallel")),
    )(xl, xg, gate_l, gate_g)

    return out_l.reshape(n, h, w, c_l), out_g.reshape(n, h, w, c_g)


# ----------------------------------------------------------------------------------
# Deterministic parameter init (PyTorch Conv2d 1x1 weights repacked as (Cin, Cout) mats)
# ----------------------------------------------------------------------------------
def init_ffcse_params(key, channels, ratio_g, r=16):
    in_cg = int(channels * ratio_g)
    in_cl = channels - in_cg
    hidden = channels // r
    assert hidden >= 1 and in_cl > 0 and in_cg > 0
    k1, k2, k3, k4, k5, k6 = jax.random.split(key, 6)
    w1 = jax.random.normal(k1, (channels, hidden), jnp.float32) * channels ** -0.5
    b1 = jax.random.normal(k2, (1, hidden), jnp.float32) * 0.01
    w2l = jax.random.normal(k3, (hidden, in_cl), jnp.float32) * hidden ** -0.5
    b2l = jax.random.normal(k4, (1, in_cl), jnp.float32) * 0.01
    w2g = jax.random.normal(k5, (hidden, in_cg), jnp.float32) * hidden ** -0.5
    b2g = jax.random.normal(k6, (1, in_cg), jnp.float32) * 0.01
    # conv_a2l / conv_a2g share their input -> fuse into one matmul (local cols first).
    w2 = jnp.concatenate([w2l, w2g], axis=1)
    b2 = jnp.concatenate([b2l, b2g], axis=1)
    return {"w1": w1, "b1": b1, "w2": w2, "b2": b2}, in_cl, in_cg


# ----------------------------------------------------------------------------------
# Pure-JAX reference (for a correctness spot-check)
# ----------------------------------------------------------------------------------
def _reference(id_l, id_g, params):
    x = jnp.concatenate([id_l, id_g], axis=-1)
    pooled = jnp.mean(x, axis=(1, 2))                                   # (N, C)
    h = jax.nn.relu(jnp.dot(pooled, params["w1"], precision="highest") + params["b1"])
    g = jax.nn.sigmoid(jnp.dot(h, params["w2"], precision="highest") + params["b2"])
    c_l = id_l.shape[-1]
    return id_l * g[:, None, None, :c_l], id_g * g[:, None, None, c_l:]


# ----------------------------------------------------------------------------------
# Demo
# ----------------------------------------------------------------------------------
if __name__ == "__main__":
    key = jax.random.PRNGKey(0)
    k_l, k_g, k_p = jax.random.split(key, 3)

    N, H, W = 2, 16, 16
    channels, ratio_g = 256, 0.5          # -> in_cl = in_cg = 128 (lane-dense), hidden = 16
    params, in_cl, in_cg = init_ffcse_params(k_p, channels, ratio_g)

    # NHWC inputs (equivalent to PyTorch NCHW id_l [2,128,16,16], id_g [2,128,16,16]).
    id_l = jax.random.normal(k_l, (N, H, W, in_cl), jnp.float32)
    id_g = jax.random.normal(k_g, (N, H, W, in_cg), jnp.float32)

    fwd = jax.jit(ffcse_forward)
    out_l, out_g = jax.block_until_ready(fwd(id_l, id_g, params))

    assert out_l.shape == (N, H, W, in_cl), out_l.shape
    assert out_g.shape == (N, H, W, in_cg), out_g.shape
    assert bool(jnp.all(jnp.isfinite(out_l))) and bool(jnp.all(jnp.isfinite(out_g)))

    ref_l, ref_g = _reference(id_l, id_g, params)
    assert bool(jnp.allclose(out_l, ref_l, atol=2e-3, rtol=2e-3))
    assert bool(jnp.allclose(out_g, ref_g, atol=2e-3, rtol=2e-3))

    print("KERNEL_OK")
</pallas_src>

<mosaic_0001>
module attributes {stable_mosaic.version = 11 : i64} {
  func.func @_scale_kernel(%arg0: i32, %arg1: i32, %arg2: memref<1x256x128xf32, #tpu.memory_space<vmem>>, %arg3: memref<1x256x128xf32, #tpu.memory_space<vmem>>, %arg4: memref<1x1x128xf32, #tpu.memory_space<vmem>>, %arg5: memref<1x1x128xf32, #tpu.memory_space<vmem>>, %arg6: memref<1x256x128xf32, #tpu.memory_space<vmem>>, %arg7: memref<1x256x128xf32, #tpu.memory_space<vmem>>) attributes {dimension_semantics = [#tpu.dimension_semantics<parallel>, #tpu.dimension_semantics<parallel>], iteration_bounds = array<i64: 2, 1>, scalar_prefetch = 0 : i64, scratch_operands = 0 : i64, tpu.core_type = #tpu.core_type<tc>, window_params = [{transform_indices = @transform_0, window_bounds = array<i64: 1, 256, 128>}, {transform_indices = @transform_1, window_bounds = array<i64: 1, 256, 128>}, {transform_indices = @transform_2, window_bounds = array<i64: 1, 1, 128>}, {transform_indices = @transform_3, window_bounds = array<i64: 1, 1, 128>}, {transform_indices = @transform_4, window_bounds = array<i64: 1, 256, 128>}, {transform_indices = @transform_5, window_bounds = array<i64: 1, 256, 128>}]} {
    %c0 = arith.constant 0 : index
    %c0_0 = arith.constant 0 : index
    %c0_1 = arith.constant 0 : index
    %0 = vector.load %arg2[%c0, %c0_0, %c0_1] : memref<1x256x128xf32, #tpu.memory_space<vmem>>, vector<1x256x128xf32>
    %c0_2 = arith.constant 0 : index
    %c0_3 = arith.constant 0 : index
    %c0_4 = arith.constant 0 : index
    %1 = vector.load %arg4[%c0_2, %c0_3, %c0_4] : memref<1x1x128xf32, #tpu.memory_space<vmem>>, vector<1x1x128xf32>
    %2 = vector.broadcast %1 : vector<1x1x128xf32> to vector<1x256x128xf32>
    %3 = arith.mulf %0, %2 : vector<1x256x128xf32>
    %c0_5 = arith.constant 0 : index
    %c0_6 = arith.constant 0 : index
    %c0_7 = arith.constant 0 : index
    %4 = vector.load %arg6[%c0_5, %c0_6, %c0_7] : memref<1x256x128xf32, #tpu.memory_space<vmem>>, vector<1x256x128xf32>
    tpu.vector_store %arg6[%c0_5, %c0_6, %c0_7], %3 {strides = array<i32>} : memref<1x256x128xf32, #tpu.memory_space<vmem>>, vector<1x256x128xf32>,
    %c0_8 = arith.constant 0 : index
    %c0_9 = arith.constant 0 : index
    %c0_10 = arith.constant 0 : index
    %5 = vector.load %arg3[%c0_8, %c0_9, %c0_10] : memref<1x256x128xf32, #tpu.memory_space<vmem>>, vector<1x256x128xf32>
    %c0_11 = arith.constant 0 : index
    %c0_12 = arith.constant 0 : index
    %c0_13 = arith.constant 0 : index
    %6 = vector.load %arg5[%c0_11, %c0_12, %c0_13] : memref<1x1x128xf32, #tpu.memory_space<vmem>>, vector<1x1x128xf32>
    %7 = vector.broadcast %6 : vector<1x1x128xf32> to vector<1x256x128xf32>
    %8 = arith.mulf %5, %7 : vector<1x256x128xf32>
    %c0_14 = arith.constant 0 : index
    %c0_15 = arith.constant 0 : index
    %c0_16 = arith.constant 0 : index
    %9 = vector.load %arg7[%c0_14, %c0_15, %c0_16] : memref<1x256x128xf32, #tpu.memory_space<vmem>>, vector<1x256x128xf32>
    tpu.vector_store %arg7[%c0_14, %c0_15, %c0_16], %8 {strides = array<i32>} : memref<1x256x128xf32, #tpu.memory_space<vmem>>, vector<1x256x128xf32>,
    return
  }
  func.func @transform_0(%arg0: i32, %arg1: i32) -> (i32, i32, i32) {
    %c0_i32 = arith.constant 0 : i32
    %c0_i32_0 = arith.constant 0 : i32
    return %arg0, %arg1, %c0_i32 : i32, i32, i32
  }
  func.func @transform_1(%arg0: i32, %arg1: i32) -> (i32, i32, i32) {
    %c0_i32 = arith.constant 0 : i32
    %c0_i32_0 = arith.constant 0 : i32
    return %arg0, %arg1, %c0_i32 : i32, i32, i32
  }
  func.func @transform_2(%arg0: i32, %arg1: i32) -> (i32, i32, i32) {
    %c0_i32 = arith.constant 0 : i32
    %c0_i32_0 = arith.constant 0 : i32
    %c0_i32_1 = arith.constant 0 : i32
    return %arg0, %c0_i32, %c0_i32_0 : i32, i32, i32
  }
  func.func @transform_3(%arg0: i32, %arg1: i32) -> (i32, i32, i32) {
    %c0_i32 = arith.constant 0 : i32
    %c0_i32_0 = arith.constant 0 : i32
    %c0_i32_1 = arith.constant 0 : i32
    return %arg0, %c0_i32, %c0_i32_0 : i32, i32, i32
  }
  func.func @transform_4(%arg0: i32, %arg1: i32) -> (i32, i32, i32) {
    %c0_i32 = arith.constant 0 : i32
    %c0_i32_0 = arith.constant 0 : i32
    return %arg0, %arg1, %c0_i32 : i32, i32, i32
  }
  func.func @transform_5(%arg0: i32, %arg1: i32) -> (i32, i32, i32) {
    %c0_i32 = arith.constant 0 : i32
    %c0_i32_0 = arith.constant 0 : i32
    return %arg0, %arg1, %c0_i32 : i32, i32, i32
  }
}

module attributes {stable_mosaic.version = 11 : i64} {
  func.func @_pool_gate_kernel(%arg0: i32, %arg1: i32, %arg2: memref<1x256x128xf32, #tpu.memory_space<vmem>>, %arg3: memref<1x256x128xf32, #tpu.memory_space<vmem>>, %arg4: memref<256x16xf32, #tpu.memory_space<vmem>>, %arg5: memref<1x16xf32, #tpu.memory_space<vmem>>, %arg6: memref<16x256xf32, #tpu.memory_space<vmem>>, %arg7: memref<1x256xf32, #tpu.memory_space<vmem>>, %arg8: memref<1x1x128xf32, #tpu.memory_space<vmem>>, %arg9: memref<1x1x128xf32, #tpu.memory_space<vmem>>, %arg10: memref<1x128xf32, #tpu.memory_space<vmem>>, %arg11: memref<1x128xf32, #tpu.memory_space<vmem>>) attributes {dimension_semantics = [#tpu.dimension_semantics<parallel>, #tpu.dimension_semantics<arbitrary>], iteration_bounds = array<i64: 2, 1>, scalar_prefetch = 0 : i64, scratch_operands = 2 : i64, tpu.core_type = #tpu.core_type<tc>, window_params = [{transform_indices = @transform_0, window_bounds = array<i64: 1, 256, 128>}, {transform_indices = @transform_1, window_bounds = array<i64: 1, 256, 128>}, {pipeline_mode = #tpu.pipeline_mode<synchronous>, transform_indices = @transform_2, window_bounds = array<i64: 256, 16>}, {pipeline_mode = #tpu.pipeline_mode<synchronous>, transform_indices = @transform_3, window_bounds = array<i64: 1, 16>}, {pipeline_mode = #tpu.pipeline_mode<synchronous>, transform_indices = @transform_4, window_bounds = array<i64: 16, 256>}, {pipeline_mode = #tpu.pipeline_mode<synchronous>, transform_indices = @transform_5, window_bounds = array<i64: 1, 256>}, {transform_indices = @transform_6, window_bounds = array<i64: 1, 1, 128>}, {transform_indices = @transform_7, window_bounds = array<i64: 1, 1, 128>}]} {
    %c0_i32 = arith.constant 0 : i32
    %0 = arith.cmpi eq, %arg1, %c0_i32 : i32
    %1 = arith.extui %0 : i1 to i32
    %c0_i32_0 = arith.constant 0 : i32
    %2 = arith.cmpi ne, %1, %c0_i32_0 : i32
    scf.if %2 {
      %cst_17 = arith.constant 0.000000e+00 : f32
      %20 = vector.broadcast %cst_17 : f32 to vector<1x128xf32>
      %c0_18 = arith.constant 0 : index
      %c0_19 = arith.constant 0 : index
      %21 = vector.load %arg10[%c0_18, %c0_19] : memref<1x128xf32, #tpu.memory_space<vmem>>, vector<1x128xf32>
      tpu.vector_store %arg10[%c0_18, %c0_19], %20 {strides = array<i32>} : memref<1x128xf32, #tpu.memory_space<vmem>>, vector<1x128xf32>,
      %cst_20 = arith.constant 0.000000e+00 : f32
      %22 = vector.broadcast %cst_20 : f32 to vector<1x128xf32>
      %c0_21 = arith.constant 0 : index
      %c0_22 = arith.constant 0 : index
      %23 = vector.load %arg11[%c0_21, %c0_22] : memref<1x128xf32, #tpu.memory_space<vmem>>, vector<1x128xf32>
      tpu.vector_store %arg11[%c0_21, %c0_22], %22 {strides = array<i32>} : memref<1x128xf32, #tpu.memory_space<vmem>>, vector<1x128xf32>,
    } else {
    }
    %c0 = arith.constant 0 : index
    %c0_1 = arith.constant 0 : index
    %3 = vector.load %arg10[%c0, %c0_1] : memref<1x128xf32, #tpu.memory_space<vmem>>, vector<1x128xf32>
    %c0_2 = arith.constant 0 : index
    %c0_3 = arith.constant 0 : index
    %c0_4 = arith.constant 0 : index
    %4 = vector.load %arg2[%c0_2, %c0_3, %c0_4] : memref<1x256x128xf32, #tpu.memory_space<vmem>>, vector<1x256x128xf32>
    %5 = vector.shape_cast %4 : vector<1x256x128xf32> to vector<256x128xf32>
    %cst = arith.constant dense<0.000000e+00> : vector<128xf32>
    %6 = vector.multi_reduction <add>, %5, %cst [0] : vector<256x128xf32> to vector<128xf32>
    %7 = vector.shape_cast %6 : vector<128xf32> to vector<1x128xf32>
    %8 = arith.addf %3, %7 : vector<1x128xf32>
    %c0_5 = arith.constant 0 : index
    %c0_6 = arith.constant 0 : index
    %9 = vector.load %arg10[%c0_5, %c0_6] : memref<1x128xf32, #tpu.memory_space<vmem>>, vector<1x128xf32>
    tpu.vector_store %arg10[%c0_5, %c0_6], %8 {strides = array<i32>} : memref<1x128xf32, #tpu.memory_space<vmem>>, vector<1x128xf32>,
    %c0_7 = arith.constant 0 : index
    %c0_8 = arith.constant 0 : index
    %10 = vector.load %arg11[%c0_7, %c0_8] : memref<1x128xf32, #tpu.memory_space<vmem>>, vector<1x128xf32>
    %c0_9 = arith.constant 0 : index
    %c0_10 = arith.constant 0 : index
    %c0_11 = arith.constant 0 : index
    %11 = vector.load %arg3[%c0_9, %c0_10, %c0_11] : memref<1x256x128xf32, #tpu.memory_space<vmem>>, vector<1x256x128xf32>
    %12 = vector.shape_cast %11 : vector<1x256x128xf32> to vector<256x128xf32>
    %cst_12 = arith.constant dense<0.000000e+00> : vector<128xf32>
    %13 = vector.multi_reduction <add>, %12, %cst_12 [0] : vector<256x128xf32> to vector<128xf32>
    %14 = vector.shape_cast %13 : vector<128xf32> to vector<1x128xf32>
    %15 = arith.addf %10, %14 : vector<1x128xf32>
    %c0_13 = arith.constant 0 : index
    %c0_14 = arith.constant 0 : index
    %16 = vector.load %arg11[%c0_13, %c0_14] : memref<1x128xf32, #tpu.memory_space<vmem>>, vector<1x128xf32>
    tpu.vector_store %arg11[%c0_13, %c0_14], %15 {strides = array<i32>} : memref<1x128xf32, #tpu.memory_space<vmem>>, vector<1x128xf32>,
    %c0_i32_15 = arith.constant 0 : i32
    %17 = arith.cmpi eq, %arg1, %c0_i32_15 : i32
    %18 = arith.extui %17 : i1 to i32
    %c0_i32_16 = arith.constant 0 : i32
    %19 = arith.cmpi ne, %18, %c0_i32_16 : i32
    scf.if %19 {
      %c0_17 = arith.constant 0 : index
      %c0_18 = arith.constant 0 : index
      %20 = vector.load %arg10[%c0_17, %c0_18] : memref<1x128xf32, #tpu.memory_space<vmem>>, vector<1x128xf32>
      %c0_19 = arith.constant 0 : index
      %c0_20 = arith.constant 0 : index
      %21 = vector.load %arg11[%c0_19, %c0_20] : memref<1x128xf32, #tpu.memory_space<vmem>>, vector<1x128xf32>
      %22 = tpu.concatenate %20, %21 in 1 : vector<1x128xf32>, vector<1x128xf32> -> vector<1x256xf32>
      %cst_21 = arith.constant 3.906250e-03 : f32
      %23 = vector.broadcast %cst_21 : f32 to vector<1x256xf32>
      %24 = arith.mulf %22, %23 : vector<1x256xf32>
      %c0_22 = arith.constant 0 : index
      %c0_23 = arith.constant 0 : index
      %25 = vector.load %arg4[%c0_22, %c0_23] : memref<256x16xf32, #tpu.memory_space<vmem>>, vector<256x16xf32>
      %cst_24 = arith.constant dense<0.000000e+00> : vector<1x16xf32>
      %26 = tpu.matmul %24, %25, %cst_24 {dimension_numbers = #tpu.dot_dimension_numbers<[1], [0], [0], [1], [0, 0, 1, 1], [], []>} : vector<1x256xf32>, vector<256x16xf32>, vector<1x16xf32> -> vector<1x16xf32>
      %c0_25 = arith.constant 0 : index
      %c0_26 = arith.constant 0 : index
      %27 = vector.load %arg5[%c0_25, %c0_26] : memref<1x16xf32, #tpu.memory_space<vmem>>, vector<1x16xf32>
      %28 = arith.addf %26, %27 : vector<1x16xf32>
      %cst_27 = arith.constant 0.000000e+00 : f32
      %29 = vector.broadcast %cst_27 : f32 to vector<1x16xf32>
      %30 = arith.maximumf %28, %29 : vector<1x16xf32>
      %c0_28 = arith.constant 0 : index
      %c0_29 = arith.constant 0 : index
      %31 = vector.load %arg6[%c0_28, %c0_29] : memref<16x256xf32, #tpu.memory_space<vmem>>, vector<16x256xf32>
      %cst_30 = arith.constant dense<0.000000e+00> : vector<1x256xf32>
      %32 = tpu.matmul %30, %31, %cst_30 {dimension_numbers = #tpu.dot_dimension_numbers<[1], [0], [0], [1], [0, 0, 1, 1], [], []>} : vector<1x16xf32>, vector<16x256xf32>, vector<1x256xf32> -> vector<1x256xf32>
      %c0_31 = arith.constant 0 : index
      %c0_32 = arith.constant 0 : index
      %33 = vector.load %arg7[%c0_31, %c0_32] : memref<1x256xf32, #tpu.memory_space<vmem>>, vector<1x256xf32>
      %34 = arith.addf %32, %33 : vector<1x256xf32>
      %35 = arith.negf %34 : vector<1x256xf32>
      %36 = math.exp %35 : vector<1x256xf32>
      %cst_33 = arith.constant 1.000000e+00 : f32
      %37 = vector.broadcast %cst_33 : f32 to vector<1x256xf32>
      %38 = arith.addf %37, %36 : vector<1x256xf32>
      %39 = arith.divf %37, %38 : vector<1x256xf32>
      %40 = vector.extract_strided_slice %39 {offsets = [0, 0], sizes = [1, 128], strides = [1, 1]} : vector<1x256xf32> to vector<1x128xf32>
      %41 = vector.shape_cast %40 : vector<1x128xf32> to vector<1x1x128xf32>
      %c0_34 = arith.constant 0 : index
      %c0_35 = arith.constant 0 : index
      %c0_36 = arith.constant 0 : index
      %42 = vector.load %arg8[%c0_34, %c0_35, %c0_36] : memref<1x1x128xf32, #tpu.memory_space<vmem>>, vector<1x1x128xf32>
      tpu.vector_store %arg8[%c0_34, %c0_35, %c0_36], %41 {strides = array<i32>} : memref<1x1x128xf32, #tpu.memory_space<vmem>>, vector<1x1x128xf32>,
      %43 = vector.extract_strided_slice %39 {offsets = [0, 128], sizes = [1, 128], strides = [1, 1]} : vector<1x256xf32> to vector<1x128xf32>
      %44 = vector.shape_cast %43 : vector<1x128xf32> to vector<1x1x128xf32>
      %c0_37 = arith.constant 0 : index
      %c0_38 = arith.constant 0 : index
      %c0_39 = arith.constant 0 : index
      %45 = vector.load %arg9[%c0_37, %c0_38, %c0_39] : memref<1x1x128xf32, #tpu.memory_space<vmem>>, vector<1x1x128xf32>
      tpu.vector_store %arg9[%c0_37, %c0_38, %c0_39], %44 {strides = array<i32>} : memref<1x1x128xf32, #tpu.memory_space<vmem>>, vector<1x1x128xf32>,
    } else {
    }
    return
  }
  func.func @transform_0(%arg0: i32, %arg1: i32) -> (i32, i32, i32) {
    %c0_i32 = arith.constant 0 : i32
    %c0_i32_0 = arith.constant 0 : i32
    return %arg0, %arg1, %c0_i32 : i32, i32, i32
  }
  func.func @transform_1(%arg0: i32, %arg1: i32) -> (i32, i32, i32) {
    %c0_i32 = arith.constant 0 : i32
    %c0_i32_0 = arith.constant 0 : i32
    return %arg0, %arg1, %c0_i32 : i32, i32, i32
  }
  func.func @transform_2(%arg0: i32, %arg1: i32) -> (i32, i32) {
    %c0_i32 = arith.constant 0 : i32
    %c0_i32_0 = arith.constant 0 : i32
    %c0_i32_1 = arith.constant 0 : i32
    return %c0_i32, %c0_i32_0 : i32, i32
  }
  func.func @transform_3(%arg0: i32, %arg1: i32) -> (i32, i32) {
    %c0_i32 = arith.constant 0 : i32
    %c0_i32_0 = arith.constant 0 : i32
    %c0_i32_1 = arith.constant 0 : i32
    return %c0_i32, %c0_i32_0 : i32, i32
  }
  func.func @transform_4(%arg0: i32, %arg1: i32) -> (i32, i32) {
    %c0_i32 = arith.constant 0 : i32
    %c0_i32_0 = arith.constant 0 : i32
    %c0_i32_1 = arith.constant 0 : i32
    return %c0_i32, %c0_i32_0 : i32, i32
  }
  func.func @transform_5(%arg0: i32, %arg1: i32) -> (i32, i32) {
    %c0_i32 = arith.constant 0 : i32
    %c0_i32_0 = arith.constant 0 : i32
    %c0_i32_1 = arith.constant 0 : i32
    return %c0_i32, %c0_i32_0 : i32, i32
  }
  func.func @transform_6(%arg0: i32, %arg1: i32) -> (i32, i32, i32) {
    %c0_i32 = arith.constant 0 : i32
    %c0_i32_0 = arith.constant 0 : i32
    %c0_i32_1 = arith.constant 0 : i32
    return %arg0, %c0_i32, %c0_i32_0 : i32, i32, i32
  }
  func.func @transform_7(%arg0: i32, %arg1: i32) -> (i32, i32, i32) {
    %c0_i32 = arith.constant 0 : i32
    %c0_i32_0 = arith.constant 0 : i32
    %c0_i32_1 = arith.constant 0 : i32
    return %arg0, %c0_i32, %c0_i32_0 : i32, i32, i32
  }
}

</mosaic_0001>

<llo_original>
// kernel: ffcse_forward.3
$region0: #{ffcse_forward.3}
  #allocation0 [shape = 'u32[]', space=smem, size = 0x4, offset = 0x4, fixed_abs, tag = 'smem constant byte address 0x4 - core index']
  #allocation1 [shape = 'u32[144,128]{1,0:T(1,128)}', space=vmem, size = 0x12000, scoped, tag = 'internal scratch']
  %s0 = inlined_call_operand.vmem [shape: f32[2,256,128], index: 0, kind: input, shape index: {}]
  %s1 = inlined_call_operand.vmem [shape: f32[2,256,128], index: 1, kind: input, shape index: {}]
  %s2 = inlined_call_operand.vmem [shape: f32[2,1,128], index: 2, kind: input, shape index: {}]
  %s3 = inlined_call_operand.vmem [shape: f32[2,1,128], index: 3, kind: input, shape index: {}]
  %s4 = inlined_call_operand.hbm [shape: f32[2,256,128], index: 4, kind: output, shape index: {0}]
  %s5 = inlined_call_operand.hbm [shape: f32[2,256,128], index: 5, kind: output, shape index: {1}]
  %6 = xla_tuple %s4, %s5
  %s7 = sld [smem:[#allocation0]]
  $region57: #{ffcse_forward.3} parent=0
    _
  %s9 = ssub.s32 1, %s7
  %s10 = scalar_select 0, %s9, %s7
  $region1: #{ffcse_forward.3} parent=0
    #allocation2 [shape = 'u8[262144]{0}', space=vmem, size = 0x40000, scoped, tag = 'output window, operand 0']
    #allocation3 [shape = 's32[2]{0}', space=sflag, size = 0x8, scoped, tag = 'scoped memory for ffcse_forward.3']
    #allocation4 [shape = 'u8[262144]{0}', space=vmem, size = 0x40000, scoped, tag = 'output window, operand 1']
    #allocation5 [shape = 's32[2]{0}', space=sflag, size = 0x8, scoped, tag = 'scoped memory for ffcse_forward.3']
    %11 = vsyncpa [#allocation3], 0
    %s12 = scalar_lea.sflag [#allocation3], 1
    %13 = vsyncpa %s12, 0
    %14 = vsyncpa [#allocation5], 0
    %s15 = scalar_lea.sflag [#allocation5], 1
    %16 = vsyncpa %s15, 0
    loop: start=0, step=1, limit=4
    $region2: #{ffcse_forward.3} parent=1 // loop_pre_header
      _
    $region3: #{ffcse_forward.3} parent=1 // loop_header
      %s18 = sphi 0, %s22
      %p19 = scmp.ge.s32.totalorder %s18, 4
      %s25 = sphi 0, %s37
      %s26 = sphi 0, %s33
      %s27 = sphi 0, %s25
      %s28 = sphi 0, %s26
      %s29 = sphi 0, %s27
      %s30 = sphi 0, %s28
      %s42 = sphi 0, %s44
      %s45 = sphi 0, %s42
      %s46 = sphi 0, %s45
      %s62 = sphi 0, %s46
      %s70 = sphi 0, %s72
      %s73 = sphi 0, %s70
      %s74 = sphi 0, %s73
      %s90 = sphi 0, %s74
      %s96 = sphi 0, %s98
      %s99 = sphi 0, %s96
      %s100 = sphi 0, %s99
      %s116 = sphi 0, %s100
      %s122 = sphi 0, %s124
      %s125 = sphi 0, %s122
      %s126 = sphi 0, %s125
      %s142 = sphi 0, %s126
      %s150 = sphi 0, %s152
      %s153 = sphi 0, %s150
      %s154 = sphi 0, %s153
      %s170 = sphi 0, %s154
      %s178 = sphi 0, %s180
      %s181 = sphi 0, %s178
      %s182 = sphi 0, %s181
      %s198 = sphi 0, %s182
    $region4: #{ffcse_forward.3} parent=1 // loop_header_branch
      %21 = sbr.rel (%p19) target = $region8
    $region5: #{ffcse_forward.3} parent=1 // loop_body
      %s23 = ssub.s32 %s18, 1
      %s24 = ssub.s32 %s18, 2
      %s31 = sadd.s32 1, %s26
      %p32 = scmp.ge.s32.totalorder %s31, 1
      %s33 = scalar_select %p32, 0, %s31
      %s34 = sadd.s32 1, %s25
      %s35 = scalar_select %p32, %s34, %s25
      %p36 = scmp.ge.s32.totalorder %s35, 2
      %s37 = scalar_select %p36, 0, %s35
      %s38 = ssub.s32 %s25, %s37
      %s39 = ssub.s32 %s26, %s33
      %s40 = sor.u32 %s38, %s39
      %p41 = scmp.eq.s32.totalorder %s40, 0
      %s43 = sadd.s32 %s42, 1
      %s44 = scalar_select %p41, %s42, %s43
      %p47 = pneg %p41
      %p48 = scmp.eq.s32.totalorder %s18, 1
      %p49 = por %p47, %p48
      %p50 = scmp.ne.s32.totalorder %s42, %s45
      %p51 = scmp.eq.s32.totalorder %s18, 0
      %p52 = por %p50, %p51
      %p53 = scmp.ne.s32.totalorder %s42, %s45
      %p54 = scmp.eq.s32.totalorder %s23, 1
      %p55 = por %p53, %p54
      %p56 = scmp.ne.s32.totalorder %s45, %s46
      %p57 = scmp.eq.s32.totalorder %s23, 0
      %p58 = por %p56, %p57
      %p59 = scmp.ne.s32.totalorder %s45, %s46
      %p60 = scmp.eq.s32.totalorder %s24, 1
      %p61 = por %p59, %p60
      %p63 = scmp.ne.s32.totalorder %s46, %s62
      %p64 = scmp.eq.s32.totalorder %s24, 0
      %p65 = por %p63, %p64
      %s66 = ssub.s32 %s25, %s37
      %s67 = ssub.s32 %s26, %s33
      %s68 = sor.u32 %s66, %s67
      %p69 = scmp.eq.s32.totalorder %s68, 0
      %s71 = sadd.s32 %s70, 1
      %s72 = scalar_select %p69, %s70, %s71
      %p75 = pneg %p69
      %p76 = scmp.eq.s32.totalorder %s18, 1
      %p77 = por %p75, %p76
      %p78 = scmp.ne.s32.totalorder %s70, %s73
      %p79 = scmp.eq.s32.totalorder %s18, 0
      %p80 = por %p78, %p79
      %p81 = scmp.ne.s32.totalorder %s70, %s73
      %p82 = scmp.eq.s32.totalorder %s23, 1
      %p83 = por %p81, %p82
      %p84 = scmp.ne.s32.totalorder %s73, %s74
      %p85 = scmp.eq.s32.totalorder %s23, 0
      %p86 = por %p84, %p85
      %p87 = scmp.ne.s32.totalorder %s73, %s74
      %p88 = scmp.eq.s32.totalorder %s24, 1
      %p89 = por %p87, %p88
      %p91 = scmp.ne.s32.totalorder %s74, %s90
      %p92 = scmp.eq.s32.totalorder %s24, 0
      %p93 = por %p91, %p92
      %s94 = ssub.s32 %s25, %s37
      %p95 = scmp.eq.s32.totalorder %s94, 0
      %s97 = sadd.s32 %s96, 1
      %s98 = scalar_select %p95, %s96, %s97
      %p101 = pneg %p95
      %p102 = scmp.eq.s32.totalorder %s18, 1
      %p103 = por %p101, %p102
      %p104 = scmp.ne.s32.totalorder %s96, %s99
      %p105 = scmp.eq.s32.totalorder %s18, 0
      %p106 = por %p104, %p105
      %p107 = scmp.ne.s32.totalorder %s96, %s99
      %p108 = scmp.eq.s32.totalorder %s23, 1
      %p109 = por %p107, %p108
      %p110 = scmp.ne.s32.totalorder %s99, %s100
      %p111 = scmp.eq.s32.totalorder %s23, 0
      %p112 = por %p110, %p111
      %p113 = scmp.ne.s32.totalorder %s99, %s100
      %p114 = scmp.eq.s32.totalorder %s24, 1
      %p115 = por %p113, %p114
      %p117 = scmp.ne.s32.totalorder %s100, %s116
      %p118 = scmp.eq.s32.totalorder %s24, 0
      %p119 = por %p117, %p118
      %s120 = ssub.s32 %s25, %s37
      %p121 = scmp.eq.s32.totalorder %s120, 0
      %s123 = sadd.s32 %s122, 1
      %s124 = scalar_select %p121, %s122, %s123
      %p127 = pneg %p121
      %p128 = scmp.eq.s32.totalorder %s18, 1
      %p129 = por %p127, %p128
      %p130 = scmp.ne.s32.totalorder %s122, %s125
      %p131 = scmp.eq.s32.totalorder %s18, 0
      %p132 = por %p130, %p131
      %p133 = scmp.ne.s32.totalorder %s122, %s125
      %p134 = scmp.eq.s32.totalorder %s23, 1
      %p135 = por %p133, %p134
      %p136 = scmp.ne.s32.totalorder %s125, %s126
      %p137 = scmp.eq.s32.totalorder %s23, 0
      %p138 = por %p136, %p137
      %p139 = scmp.ne.s32.totalorder %s125, %s126
      %p140 = scmp.eq.s32.totalorder %s24, 1
      %p141 = por %p139, %p140
      %p143 = scmp.ne.s32.totalorder %s126, %s142
      %p144 = scmp.eq.s32.totalorder %s24, 0
      %p145 = por %p143, %p144
      %s146 = ssub.s32 %s25, %s37
      %s147 = ssub.s32 %s26, %s33
      %s148 = sor.u32 %s146, %s147
      %p149 = scmp.eq.s32.totalorder %s148, 0
      %s151 = sadd.s32 %s150, 1
      %s152 = scalar_select %p149, %s150, %s151
      %p155 = pneg %p149
      %p156 = scmp.eq.s32.totalorder %s18, 1
      %p157 = por %p155, %p156
      %p158 = scmp.ne.s32.totalorder %s150, %s153
      %p159 = scmp.eq.s32.totalorder %s18, 0
      %p160 = por %p158, %p159
      %p161 = scmp.ne.s32.totalorder %s150, %s153
      %p162 = scmp.eq.s32.totalorder %s23, 1
      %p163 = por %p161, %p162
      %p164 = scmp.ne.s32.totalorder %s153, %s154
      %p165 = scmp.eq.s32.totalorder %s23, 0
      %p166 = por %p164, %p165
      %p167 = scmp.ne.s32.totalorder %s153, %s154
      %p168 = scmp.eq.s32.totalorder %s24, 1
      %p169 = por %p167, %p168
      %p171 = scmp.ne.s32.totalorder %s154, %s170
      %p172 = scmp.eq.s32.totalorder %s24, 0
      %p173 = por %p171, %p172
      %s174 = ssub.s32 %s25, %s37
      %s175 = ssub.s32 %s26, %s33
      %s176 = sor.u32 %s174, %s175
      %p177 = scmp.eq.s32.totalorder %s176, 0
      %s179 = sadd.s32 %s178, 1
      %s180 = scalar_select %p177, %s178, %s179
      %p183 = pneg %p177
      %p184 = scmp.eq.s32.totalorder %s18, 1
      %p185 = por %p183, %p184
      %p186 = scmp.ne.s32.totalorder %s178, %s181
      %p187 = scmp.eq.s32.totalorder %s18, 0
      %p188 = por %p186, %p187
      %p189 = scmp.ne.s32.totalorder %s178, %s181
      %p190 = scmp.eq.s32.totalorder %s23, 1
      %p191 = por %p189, %p190
      %p192 = scmp.ne.s32.totalorder %s181, %s182
      %p193 = scmp.eq.s32.totalorder %s23, 0
      %p194 = por %p192, %p193
      %p195 = scmp.ne.s32.totalorder %s181, %s182
      %p196 = scmp.eq.s32.totalorder %s24, 1
      %p197 = por %p195, %p196
      %p199 = scmp.ne.s32.totalorder %s182, %s198
      %p200 = scmp.eq.s32.totalorder %s24, 0
      %p201 = por %p199, %p200
      %p202 = scmp.le.s32.totalorder 1, %s18
      %p203 = scmp.lt.s32.totalorder %s18, 3
      %p204 = pnand %p202, %p203
      %p205 = pneg %p204
      // Predicated region
      $region9: #{ffcse_forward.3} parent=5 // pred_check
        _
      $region10: #{ffcse_forward.3} parent=5 // pred_check_branch
        %207 = sbr.rel (%p204) target = $region12
      $region11: #{ffcse_forward.3} parent=5 // pred_region
        %s208 = ssub.s32 %s18, 1
      $region12: #{ffcse_forward.3} parent=5 // pred_fallthru
        _
      %p209 = scmp.lt.s32.totalorder %s18, 2
      // Predicated region
      $region13: #{ffcse_forward.3} parent=5 // pred_check
        %p210 = pneg %p209
      $region14: #{ffcse_forward.3} parent=5 // pred_check_branch
        %212 = sbr.rel (%p210) target = $region16
      $region15: #{ffcse_forward.3} parent=5 // pred_region
        // Predicated region
        $region17: #{ffcse_forward.3} parent=15 // pred_check
          %p213 = pneg %p52
        $region18: #{ffcse_forward.3} parent=15 // pred_check_branch
          %215 = sbr.rel (%p213) target = $region20
        $region19: #{ffcse_forward.3} parent=15 // pred_region
          %s216 = smul.u32 32, %s26
          %p217 = scmp.lt.s32.totalorder %s25, 1
          %s218 = scalar_select %p217, %s25, 1
          %p219 = scmp.lt.s32.totalorder %s216, 31
          %s220 = scalar_select %p219, %s216, 31
          %s221 = smul.addr %s218, 32
          %s222 = sadd.s32 %s220, %s221
          %s223 = smul.addr %s222, 8
          %s224 = scalar_lea.vmem %s0, %s223
          %s225 = smul.u32 32, %s26
        $region20: #{ffcse_forward.3} parent=15 // pred_fallthru
          _
        // Predicated region
        $region21: #{ffcse_forward.3} parent=15 // pred_check
          %p226 = pneg %p80
        $region22: #{ffcse_forward.3} parent=15 // pred_check_branch
          %228 = sbr.rel (%p226) target = $region24
        $region23: #{ffcse_forward.3} parent=15 // pred_region
          %s229 = smul.u32 32, %s26
          %p230 = scmp.lt.s32.totalorder %s25, 1
          %s231 = scalar_select %p230, %s25, 1
          %p232 = scmp.lt.s32.totalorder %s229, 31
          %s233 = scalar_select %p232, %s229, 31
          %s234 = smul.addr %s231, 32
          %s235 = sadd.s32 %s233, %s234
          %s236 = smul.addr %s235, 8
          %s237 = scalar_lea.vmem %s1, %s236
          %s238 = smul.u32 32, %s26
        $region24: #{ffcse_forward.3} parent=15 // pred_fallthru
          _
        // Predicated region
        $region25: #{ffcse_forward.3} parent=15 // pred_check
          %p239 = pneg %p106
        $region26: #{ffcse_forward.3} parent=15 // pred_check_branch
          %241 = sbr.rel (%p239) target = $region28
        $region27: #{ffcse_forward.3} parent=15 // pred_region
          %p242 = scmp.lt.s32.totalorder %s25, 1
          %s243 = scalar_select %p242, %s25, 1
          %s244 = scalar_lea.vmem %s2, %s243
        $region28: #{ffcse_forward.3} parent=15 // pred_fallthru
          _
        // Predicated region
        $region29: #{ffcse_forward.3} parent=15 // pred_check
          %p245 = pneg %p132
        $region30: #{ffcse_forward.3} parent=15 // pred_check_branch
          %247 = sbr.rel (%p245) target = $region32
        $region31: #{ffcse_forward.3} parent=15 // pred_region
          %p248 = scmp.lt.s32.totalorder %s25, 1
          %s249 = scalar_select %p248, %s25, 1
          %s250 = scalar_lea.vmem %s3, %s249
        $region32: #{ffcse_forward.3} parent=15 // pred_fallthru
          _
      $region16: #{ffcse_forward.3} parent=5 // pred_fallthru
        _
      %p251 = scmp.le.s32.totalorder 1, %s18
      %p252 = scmp.lt.s32.totalorder %s18, 3
      %p253 = pnand %p251, %p252
      %p254 = pneg %p253
      // Predicated region
      $region33: #{ffcse_forward.3} parent=5 // pred_check
        _
      $region34: #{ffcse_forward.3} parent=5 // pred_check_branch
        %256 = sbr.rel (%p253) target = $region36
      $region35: #{ffcse_forward.3} parent=5 // pred_region
        %s257 = ssub.s32 %s18, 1
        %s258 = smul.u32 32, %s28
        %p259 = scmp.lt.s32.totalorder %s27, 1
        %s260 = scalar_select %p259, %s27, 1
        %p261 = scmp.lt.s32.totalorder %s258, 31
        %s262 = scalar_select %p261, %s258, 31
        %s263 = smul.addr %s260, 32
        %s264 = sadd.s32 %s262, %s263
        %s265 = smul.addr %s264, 8
        %s266 = scalar_lea.vmem %s0, %s265
        %p267 = pneg %p58
        %p268 = pneg %p55
        %s269 = smul.u32 32, %s28
        %p270 = scmp.lt.s32.totalorder %s27, 1
        %s271 = scalar_select %p270, %s27, 1
        %p272 = scmp.lt.s32.totalorder %s269, 31
        %s273 = scalar_select %p272, %s269, 31
        %s274 = smul.addr %s271, 32
        %s275 = sadd.s32 %s273, %s274
        %s276 = smul.addr %s275, 8
        %s277 = scalar_lea.vmem %s1, %s276
        %p278 = pneg %p86
        %p279 = pneg %p83
        %p280 = scmp.lt.s32.totalorder %s27, 1
        %s281 = scalar_select %p280, %s27, 1
        %s282 = scalar_lea.vmem %s2, %s281
        %p283 = pneg %p112
        %p284 = pneg %p109
        %p285 = scmp.lt.s32.totalorder %s27, 1
        %s286 = scalar_select %p285, %s27, 1
        %s287 = scalar_lea.vmem %s3, %s286
        %p288 = pneg %p138
        %p289 = pneg %p135
        %p290 = pneg %p166
        %p291 = pneg %p163
        %s292 = sand.u32 %s153, 1
        %s293 = scalar_lea.sflag [#allocation3], %s292
        %s294 = sand.u32 %s153, 1
        %s295 = smul.addr %s294, 256
        %s296 = scalar_lea.vmem [#allocation2], %s295
        %p297 = pneg %p194
        %p298 = pneg %p191
        %s299 = sand.u32 %s181, 1
        %s300 = scalar_lea.sflag [#allocation5], %s299
        %s301 = sand.u32 %s181, 1
        %s302 = smul.addr %s301, 256
        %s303 = scalar_lea.vmem [#allocation4], %s302
        %s304 = smul.u32 32, %s28
        %p305 = scmp.lt.s32.totalorder %s27, 1
        %s306 = scalar_select %p305, %s27, 1
        %p307 = scmp.lt.s32.totalorder %s304, 31
        %s308 = scalar_select %p307, %s304, 31
        %s309 = smul.addr %s306, 32
        %s310 = sadd.s32 %s308, %s309
        %s311 = smul.addr %s310, 8
        %s312 = scalar_lea.vmem %s0, %s311
        %s313 = smul.u32 32, %s28
        %s314 = smul.u32 32, %s28
        %p315 = scmp.lt.s32.totalorder %s27, 1
        %s316 = scalar_select %p315, %s27, 1
        %p317 = scmp.lt.s32.totalorder %s314, 31
        %s318 = scalar_select %p317, %s314, 31
        %s319 = smul.addr %s316, 32
        %s320 = sadd.s32 %s318, %s319
        %s321 = smul.addr %s320, 8
        %s322 = scalar_lea.vmem %s1, %s321
        %s323 = smul.u32 32, %s28
        %p324 = scmp.lt.s32.totalorder %s27, 1
        %s325 = scalar_select %p324, %s27, 1
        %s326 = scalar_lea.vmem %s2, %s325
        %p327 = scmp.lt.s32.totalorder %s27, 1
        %s328 = scalar_select %p327, %s27, 1
        %s329 = scalar_lea.vmem %s3, %s328
        %s330 = smul.u32 32, %s28
        %s331 = smul.u32 32, %s28
        %v332 = vld [vmem:[%s312] sm:$0xff]
        %v333 = vld [vmem:[%s312 + $0x8] sm:$0xff]
        %v334 = vld [vmem:[%s312 + $0x10] sm:$0xff]
        %v335 = vld [vmem:[%s312 + $0x18] sm:$0xff]
        %v336 = vld [vmem:[%s312 + $0x20] sm:$0xff]
        %v337 = vld [vmem:[%s312 + $0x28] sm:$0xff]
        %v338 = vld [vmem:[%s312 + $0x30] sm:$0xff]
        %v339 = vld [vmem:[%s312 + $0x38] sm:$0xff]
        %v340 = vld [vmem:[%s312 + $0x40] sm:$0xff]
        %v341 = vld [vmem:[%s312 + $0x48] sm:$0xff]
        %v342 = vld [vmem:[%s312 + $0x50] sm:$0xff]
        %v343 = vld [vmem:[%s312 + $0x58] sm:$0xff]
        %v344 = vld [vmem:[%s312 + $0x60] sm:$0xff]
        %v345 = vld [vmem:[%s312 + $0x68] sm:$0xff]
        %v346 = vld [vmem:[%s312 + $0x70] sm:$0xff]
        %v347 = vld [vmem:[%s312 + $0x78] sm:$0xff]
        %v348 = vld [vmem:[%s312 + $0x80] sm:$0xff]
        %v349 = vld [vmem:[%s312 + $0x88] sm:$0xff]
        %v350 = vld [vmem:[%s312 + $0x90] sm:$0xff]
        %v351 = vld [vmem:[%s312 + $0x98] sm:$0xff]
        %v352 = vld [vmem:[%s312 + $0xa0] sm:$0xff]
        %v353 = vld [vmem:[%s312 + $0xa8] sm:$0xff]
        %v354 = vld [vmem:[%s312 + $0xb0] sm:$0xff]
        %v355 = vld [vmem:[%s312 + $0xb8] sm:$0xff]
        %v356 = vld [vmem:[%s312 + $0xc0] sm:$0xff]
        %v357 = vld [vmem:[%s312 + $0xc8] sm:$0xff]
        %v358 = vld [vmem:[%s312 + $0xd0] sm:$0xff]
        %v359 = vld [vmem:[%s312 + $0xd8] sm:$0xff]
        %v360 = vld [vmem:[%s312 + $0xe0] sm:$0xff]
        %v361 = vld [vmem:[%s312 + $0xe8] sm:$0xff]
        %v362 = vld [vmem:[%s312 + $0xf0] sm:$0xff]
        %v363 = vld [vmem:[%s312 + $0xf8] sm:$0xff]
        %v364 = vld [vmem:[%s326] sm:$0x1]
        %v366 = vlaneseq
        %v367 = vshrl.u32 %v366, 7
        %v368 = vsub.s32 0, %v367
        %v369 = vrot.slane %v364, %v368
        %v371 = vmul.f32 %v332, %v369
        %v372 = vmul.f32 %v333, %v369
        %v373 = vmul.f32 %v334, %v369
        %v374 = vmul.f32 %v335, %v369
        %v375 = vmul.f32 %v336, %v369
        %v376 = vmul.f32 %v337, %v369
        %v377 = vmul.f32 %v338, %v369
        %v378 = vmul.f32 %v339, %v369
        %v379 = vmul.f32 %v340, %v369
        %v380 = vmul.f32 %v341, %v369
        %v381 = vmul.f32 %v342, %v369
        %v382 = vmul.f32 %v343, %v369
        %v383 = vmul.f32 %v344, %v369
        %v384 = vmul.f32 %v345, %v369
        %v385 = vmul.f32 %v346, %v369
        %v386 = vmul.f32 %v347, %v369
        %v387 = vmul.f32 %v348, %v369
        %v388 = vmul.f32 %v349, %v369
        %v389 = vmul.f32 %v350, %v369
        %v390 = vmul.f32 %v351, %v369
        %v391 = vmul.f32 %v352, %v369
        %v392 = vmul.f32 %v353, %v369
        %v393 = vmul.f32 %v354, %v369
        %v394 = vmul.f32 %v355, %v369
        %v395 = vmul.f32 %v356, %v369
        %v396 = vmul.f32 %v357, %v369
        %v397 = vmul.f32 %v358, %v369
        %v398 = vmul.f32 %v359, %v369
        %v399 = vmul.f32 %v360, %v369
        %v400 = vmul.f32 %v361, %v369
        %v401 = vmul.f32 %v362, %v369
        %v402 = vmul.f32 %v363, %v369
        %403 = vst [vmem:[%s296] sm:$0xff] %v371
        %404 = vst [vmem:[%s296 + $0x8] sm:$0xff] %v372
        %405 = vst [vmem:[%s296 + $0x10] sm:$0xff] %v373
        %406 = vst [vmem:[%s296 + $0x18] sm:$0xff] %v374
        %407 = vst [vmem:[%s296 + $0x20] sm:$0xff] %v375
        %408 = vst [vmem:[%s296 + $0x28] sm:$0xff] %v376
        %409 = vst [vmem:[%s296 + $0x30] sm:$0xff] %v377
        %410 = vst [vmem:[%s296 + $0x38] sm:$0xff] %v378
        %411 = vst [vmem:[%s296 + $0x40] sm:$0xff] %v379
        %412 = vst [vmem:[%s296 + $0x48] sm:$0xff] %v380
        %413 = vst [vmem:[%s296 + $0x50] sm:$0xff] %v381
        %414 = vst [vmem:[%s296 + $0x58] sm:$0xff] %v382
        %415 = vst [vmem:[%s296 + $0x60] sm:$0xff] %v383
        %416 = vst [vmem:[%s296 + $0x68] sm:$0xff] %v384
        %417 = vst [vmem:[%s296 + $0x70] sm:$0xff] %v385
        %418 = vst [vmem:[%s296 + $0x78] sm:$0xff] %v386
        %419 = vst [vmem:[%s296 + $0x80] sm:$0xff] %v387
        %420 = vst [vmem:[%s296 + $0x88] sm:$0xff] %v388
        %421 = vst [vmem:[%s296 + $0x90] sm:$0xff] %v389
        %422 = vst [vmem:[%s296 + $0x98] sm:$0xff] %v390
        %423 = vst [vmem:[%s296 + $0xa0] sm:$0xff] %v391
        %424 = vst [vmem:[%s296 + $0xa8] sm:$0xff] %v392
        %425 = vst [vmem:[%s296 + $0xb0] sm:$0xff] %v393
        %426 = vst [vmem:[%s296 + $0xb8] sm:$0xff] %v394
        %427 = vst [vmem:[%s296 + $0xc0] sm:$0xff] %v395
        %428 = vst [vmem:[%s296 + $0xc8] sm:$0xff] %v396
        %429 = vst [vmem:[%s296 + $0xd0] sm:$0xff] %v397
        %430 = vst [vmem:[%s296 + $0xd8] sm:$0xff] %v398
        %431 = vst [vmem:[%s296 + $0xe0] sm:$0xff] %v399
        %432 = vst [vmem:[%s296 + $0xe8] sm:$0xff] %v400
        %433 = vst [vmem:[%s296 + $0xf0] sm:$0xff] %v401
        %434 = vst [vmem:[%s296 + $0xf8] sm:$0xff] %v402
        %v435 = vld [vmem:[%s322] sm:$0xff]
        %v436 = vld [vmem:[%s322 + $0x8] sm:$0xff]
        %v437 = vld [vmem:[%s322 + $0x10] sm:$0xff]
        %v438 = vld [vmem:[%s322 + $0x18] sm:$0xff]
        %v439 = vld [vmem:[%s322 + $0x20] sm:$0xff]
        %v440 = vld [vmem:[%s322 + $0x28] sm:$0xff]
        %v441 = vld [vmem:[%s322 + $0x30] sm:$0xff]
        %v442 = vld [vmem:[%s322 + $0x38] sm:$0xff]
        %v443 = vld [vmem:[%s322 + $0x40] sm:$0xff]
        %v444 = vld [vmem:[%s322 + $0x48] sm:$0xff]
        %v445 = vld [vmem:[%s322 + $0x50] sm:$0xff]
        %v446 = vld [vmem:[%s322 + $0x58] sm:$0xff]
        %v447 = vld [vmem:[%s322 + $0x60] sm:$0xff]
        %v448 = vld [vmem:[%s322 + $0x68] sm:$0xff]
        %v449 = vld [vmem:[%s322 + $0x70] sm:$0xff]
        %v450 = vld [vmem:[%s322 + $0x78] sm:$0xff]
        %v451 = vld [vmem:[%s322 + $0x80] sm:$0xff]
        %v452 = vld [vmem:[%s322 + $0x88] sm:$0xff]
        %v453 = vld [vmem:[%s322 + $0x90] sm:$0xff]
        %v454 = vld [vmem:[%s322 + $0x98] sm:$0xff]
        %v455 = vld [vmem:[%s322 + $0xa0] sm:$0xff]
        %v456 = vld [vmem:[%s322 + $0xa8] sm:$0xff]
        %v457 = vld [vmem:[%s322 + $0xb0] sm:$0xff]
        %v458 = vld [vmem:[%s322 + $0xb8] sm:$0xff]
        %v459 = vld [vmem:[%s322 + $0xc0] sm:$0xff]
        %v460 = vld [vmem:[%s322 + $0xc8] sm:$0xff]
        %v461 = vld [vmem:[%s322 + $0xd0] sm:$0xff]
        %v462 = vld [vmem:[%s322 + $0xd8] sm:$0xff]
        %v463 = vld [vmem:[%s322 + $0xe0] sm:$0xff]
        %v464 = vld [vmem:[%s322 + $0xe8] sm:$0xff]
        %v465 = vld [vmem:[%s322 + $0xf0] sm:$0xff]
        %v466 = vld [vmem:[%s322 + $0xf8] sm:$0xff]
        %v467 = vld [vmem:[%s329] sm:$0x1]
        %v469 = vlaneseq
        %v470 = vshrl.u32 %v469, 7
        %v471 = vsub.s32 0, %v470
        %v472 = vrot.slane %v467, %v471
        %v474 = vmul.f32 %v435, %v472
        %v475 = vmul.f32 %v436, %v472
        %v476 = vmul.f32 %v437, %v472
        %v477 = vmul.f32 %v438, %v472
        %v478 = vmul.f32 %v439, %v472
        %v479 = vmul.f32 %v440, %v472
        %v480 = vmul.f32 %v441, %v472
        %v481 = vmul.f32 %v442, %v472
        %v482 = vmul.f32 %v443, %v472
        %v483 = vmul.f32 %v444, %v472
        %v484 = vmul.f32 %v445, %v472
        %v485 = vmul.f32 %v446, %v472
        %v486 = vmul.f32 %v447, %v472
        %v487 = vmul.f32 %v448, %v472
        %v488 = vmul.f32 %v449, %v472
        %v489 = vmul.f32 %v450, %v472
        %v490 = vmul.f32 %v451, %v472
        %v491 = vmul.f32 %v452, %v472
        %v492 = vmul.f32 %v453, %v472
        %v493 = vmul.f32 %v454, %v472
        %v494 = vmul.f32 %v455, %v472
        %v495 = vmul.f32 %v456, %v472
        %v496 = vmul.f32 %v457, %v472
        %v497 = vmul.f32 %v458, %v472
        %v498 = vmul.f32 %v459, %v472
        %v499 = vmul.f32 %v460, %v472
        %v500 = vmul.f32 %v461, %v472
        %v501 = vmul.f32 %v462, %v472
        %v502 = vmul.f32 %v463, %v472
        %v503 = vmul.f32 %v464, %v472
        %v504 = vmul.f32 %v465, %v472
        %v505 = vmul.f32 %v466, %v472
        %506 = vst [vmem:[%s303] sm:$0xff] %v474
        %507 = vst [vmem:[%s303 + $0x8] sm:$0xff] %v475
        %508 = vst [vmem:[%s303 + $0x10] sm:$0xff] %v476
        %509 = vst [vmem:[%s303 + $0x18] sm:$0xff] %v477
        %510 = vst [vmem:[%s303 + $0x20] sm:$0xff] %v478
        %511 = vst [vmem:[%s303 + $0x28] sm:$0xff] %v479
        %512 = vst [vmem:[%s303 + $0x30] sm:$0xff] %v480
        %513 = vst [vmem:[%s303 + $0x38] sm:$0xff] %v481
        %514 = vst [vmem:[%s303 + $0x40] sm:$0xff] %v482
        %515 = vst [vmem:[%s303 + $0x48] sm:$0xff] %v483
        %516 = vst [vmem:[%s303 + $0x50] sm:$0xff] %v484
        %517 = vst [vmem:[%s303 + $0x58] sm:$0xff] %v485
        %518 = vst [vmem:[%s303 + $0x60] sm:$0xff] %v486
        %519 = vst [vmem:[%s303 + $0x68] sm:$0xff] %v487
        %520 = vst [vmem:[%s303 + $0x70] sm:$0xff] %v488
        %521 = vst [vmem:[%s303 + $0x78] sm:$0xff] %v489
        %522 = vst [vmem:[%s303 + $0x80] sm:$0xff] %v490
        %523 = vst [vmem:[%s303 + $0x88] sm:$0xff] %v491
        %524 = vst [vmem:[%s303 + $0x90] sm:$0xff] %v492
        %525 = vst [vmem:[%s303 + $0x98] sm:$0xff] %v493
        %526 = vst [vmem:[%s303 + $0xa0] sm:$0xff] %v494
        %527 = vst [vmem:[%s303 + $0xa8] sm:$0xff] %v495
        %528 = vst [vmem:[%s303 + $0xb0] sm:$0xff] %v496
        %529 = vst [vmem:[%s303 + $0xb8] sm:$0xff] %v497
        %530 = vst [vmem:[%s303 + $0xc0] sm:$0xff] %v498
        %531 = vst [vmem:[%s303 + $0xc8] sm:$0xff] %v499
        %532 = vst [vmem:[%s303 + $0xd0] sm:$0xff] %v500
        %533 = vst [vmem:[%s303 + $0xd8] sm:$0xff] %v501
        %534 = vst [vmem:[%s303 + $0xe0] sm:$0xff] %v502
        %535 = vst [vmem:[%s303 + $0xe8] sm:$0xff] %v503
        %536 = vst [vmem:[%s303 + $0xf0] sm:$0xff] %v504
        %537 = vst [vmem:[%s303 + $0xf8] sm:$0xff] %v505
        %s538 = sand.u32 %s153, 1
        %s539 = scalar_lea.sflag [#allocation3], %s538
        %s540 = sand.u32 %s153, 1
        %s541 = smul.addr %s540, 256
        %s542 = scalar_lea.vmem [#allocation2], %s541
        %s543 = sand.u32 %s181, 1
        %s544 = scalar_lea.sflag [#allocation5], %s543
        %s545 = sand.u32 %s181, 1
        %s546 = smul.addr %s545, 256
        %s547 = scalar_lea.vmem [#allocation4], %s546
        // Predicated region
        $region37: #{ffcse_forward.3} parent=35 // pred_check
          %p548 = pneg %p163
        $region38: #{ffcse_forward.3} parent=35 // pred_check_branch
          %550 = sbr.rel (%p548) target = $region40
        $region39: #{ffcse_forward.3} parent=35 // pred_region
          %s551 = smul.u32 32, %s28
          %s553 = ssub.s32 4096, 4096
          %554 = vsyncadd %s539, %s553
          %s555 = smul.addr %s27, 32
          %s556 = sadd.s32 %s551, %s555
          %s557 = smul.addr %s556, 128
          %s558 = scalar_lea.hbm %s4, %s557
          %s559 = sshll.u32 %s542, 4
          %s560 = int_to_ptr.vmem [resolvable:$true] %s559
          %565 = dma.vmem_to_hbm [thread:$0]  %s560, 4096, %s558, %s539, 128, 128, 8
        $region40: #{ffcse_forward.3} parent=35 // pred_fallthru
          _
        // Predicated region
        $region41: #{ffcse_forward.3} parent=35 // pred_check
          %p566 = pneg %p191
        $region42: #{ffcse_forward.3} parent=35 // pred_check_branch
          %568 = sbr.rel (%p566) target = $region44
        $region43: #{ffcse_forward.3} parent=35 // pred_region
          %s569 = smul.u32 32, %s28
          %s571 = ssub.s32 4096, 4096
          %572 = vsyncadd %s544, %s571
          %s573 = smul.addr %s27, 32
          %s574 = sadd.s32 %s569, %s573
          %s575 = smul.addr %s574, 128
          %s576 = scalar_lea.hbm %s5, %s575
          %s577 = sshll.u32 %s547, 4
          %s578 = int_to_ptr.vmem [resolvable:$true] %s577
          %583 = dma.vmem_to_hbm [thread:$0]  %s578, 4096, %s576, %s544, 128, 128, 8
        $region44: #{ffcse_forward.3} parent=35 // pred_fallthru
          _
      $region36: #{ffcse_forward.3} parent=5 // pred_fallthru
        _
      %p584 = scmp.le.s32.totalorder 2, %s18
      // Predicated region
      $region45: #{ffcse_forward.3} parent=5 // pred_check
        %p585 = pneg %p584
      $region46: #{ffcse_forward.3} parent=5 // pred_check_branch
        %587 = sbr.rel (%p585) target = $region48
      $region47: #{ffcse_forward.3} parent=5 // pred_region
        %s588 = ssub.s32 %s18, 2
        // Predicated region
        $region49: #{ffcse_forward.3} parent=47 // pred_check
          %p589 = pneg %p169
        $region50: #{ffcse_forward.3} parent=47 // pred_check_branch
          %591 = sbr.rel (%p589) target = $region52
        $region51: #{ffcse_forward.3} parent=47 // pred_region
          %s592 = sand.u32 %s154, 1
          %s593 = scalar_lea.sflag [#allocation3], %s592
          %s594 = sand.u32 %s154, 1
          %s595 = smul.addr %s594, 256
          %s596 = scalar_lea.vmem [#allocation2], %s595
          %597 = dma.done %s593, 4096
        $region52: #{ffcse_forward.3} parent=47 // pred_fallthru
          _
        // Predicated region
        $region53: #{ffcse_forward.3} parent=47 // pred_check
          %p598 = pneg %p197
        $region54: #{ffcse_forward.3} parent=47 // pred_check_branch
          %600 = sbr.rel (%p598) target = $region56
        $region55: #{ffcse_forward.3} parent=47 // pred_region
          %s601 = sand.u32 %s182, 1
          %s602 = scalar_lea.sflag [#allocation5], %s601
          %s603 = sand.u32 %s182, 1
          %s604 = smul.addr %s603, 256
          %s605 = scalar_lea.vmem [#allocation4], %s604
          %606 = dma.done %s602, 4096
        $region56: #{ffcse_forward.3} parent=47 // pred_fallthru
          _
      $region48: #{ffcse_forward.3} parent=5 // pred_fallthru
        _
    $region6: #{ffcse_forward.3} parent=1 // loop_footer
      %s22 = sadd.s32 1, %s18
    $region7: #{ffcse_forward.3} parent=1 // loop_footer_branch
      %17 = sbr.rel target = $region3
    $region8: #{ffcse_forward.3} parent=1 // loop_exit
      _
    %607 = vsyncpa [#allocation3], 1
    %s608 = scalar_lea.sflag [#allocation3], 1
    %609 = vsyncpa %s608, 1
    %610 = vsyncpa [#allocation5], 1
    %s611 = scalar_lea.sflag [#allocation5], 1
    %612 = vsyncpa %s611, 1

// kernel: ffcse_forward.2
$region0: #{ffcse_forward.2}
  #allocation0 [shape = 'u32[]', space=smem, size = 0x4, offset = 0x4, fixed_abs, tag = 'smem constant byte address 0x4 - core index']
  #allocation1 [shape = 'u32[144,128]{1,0:T(1,128)}', space=vmem, size = 0x12000, scoped, tag = 'internal scratch']
  #allocation2 [shape = 'f32[1,128]{1,0:T(1,128)}', space=vmem, size = 0x200, scoped, tag = 'scratch operand']
  #allocation3 [shape = 'f32[1,128]{1,0:T(1,128)}', space=vmem, size = 0x200, scoped, tag = 'scratch operand']
  %s0 = inlined_call_operand.hbm [shape: f32[2,256,128], index: 0, kind: input, shape index: {}]
  %s1 = inlined_call_operand.hbm [shape: f32[2,256,128], index: 1, kind: input, shape index: {}]
  %s2 = inlined_call_operand.vmem [shape: f32[256,16], index: 2, kind: input, shape index: {}]
  %s3 = inlined_call_operand.vmem [shape: f32[1,16], index: 3, kind: input, shape index: {}]
  %s4 = inlined_call_operand.vmem [shape: f32[16,256], index: 4, kind: input, shape index: {}]
  %s5 = inlined_call_operand.vmem [shape: f32[1,256], index: 5, kind: input, shape index: {}]
  %s6 = inlined_call_operand.vmem [shape: f32[2,1,128], index: 6, kind: output, shape index: {0}]
  %s7 = inlined_call_operand.vmem [shape: f32[2,1,128], index: 7, kind: output, shape index: {1}]
  %8 = xla_tuple %s6, %s7
  %s9 = sld [smem:[#allocation0]]
  $region81: #{ffcse_forward.2} parent=0
    _
  %s11 = ssub.s32 1, %s9
  %s12 = scalar_select 0, %s11, %s9
  $region1: #{ffcse_forward.2} parent=0
    #allocation4 [shape = 'u8[262144]{0}', space=vmem, size = 0x40000, scoped, tag = 'input window, operand 0']
    #allocation5 [shape = 's32[2]{0}', space=sflag, size = 0x8, scoped, tag = 'scoped memory for ffcse_forward.2']
    #allocation6 [shape = 'u8[262144]{0}', space=vmem, size = 0x40000, scoped, tag = 'input window, operand 1']
    #allocation7 [shape = 's32[2]{0}', space=sflag, size = 0x8, scoped, tag = 'scoped memory for ffcse_forward.2']
    %13 = vsyncpa [#allocation5], 0
    %s14 = scalar_lea.sflag [#allocation5], 1
    %15 = vsyncpa %s14, 0
    %16 = vsyncpa [#allocation7], 0
    %s17 = scalar_lea.sflag [#allocation7], 1
    %18 = vsyncpa %s17, 0
    loop: start=0, step=1, limit=4
    $region2: #{ffcse_forward.2} parent=1 // loop_pre_header
      _
    $region3: #{ffcse_forward.2} parent=1 // loop_header
      %s20 = sphi 0, %s24
      %p21 = scmp.ge.s32.totalorder %s20, 4
      %s27 = sphi 0, %s39
      %s28 = sphi 0, %s35
      %s29 = sphi 0, %s27
      %s30 = sphi 0, %s28
      %s31 = sphi 0, %s29
      %s32 = sphi 0, %s30
      %s44 = sphi 0, %s46
      %s47 = sphi 0, %s44
      %s48 = sphi 0, %s47
      %s64 = sphi 0, %s48
      %s72 = sphi 0, %s74
      %s75 = sphi 0, %s72
      %s76 = sphi 0, %s75
      %s92 = sphi 0, %s76
      %s96 = sphi 0, %s96
      %s98 = sphi 0, %s96
      %s99 = sphi 0, %s98
      %s113 = sphi 0, %s99
      %s117 = sphi 0, %s117
      %s119 = sphi 0, %s117
      %s120 = sphi 0, %s119
      %s134 = sphi 0, %s120
      %s138 = sphi 0, %s138
      %s140 = sphi 0, %s138
      %s141 = sphi 0, %s140
      %s155 = sphi 0, %s141
      %s159 = sphi 0, %s159
      %s161 = sphi 0, %s159
      %s162 = sphi 0, %s161
      %s176 = sphi 0, %s162
      %s182 = sphi 0, %s184
      %s185 = sphi 0, %s182
      %s186 = sphi 0, %s185
      %s202 = sphi 0, %s186
      %s208 = sphi 0, %s210
      %s211 = sphi 0, %s208
      %s212 = sphi 0, %s211
      %s228 = sphi 0, %s212
    $region4: #{ffcse_forward.2} parent=1 // loop_header_branch
      %23 = sbr.rel (%p21) target = $region8
    $region5: #{ffcse_forward.2} parent=1 // loop_body
      %s25 = ssub.s32 %s20, 1
      %s26 = ssub.s32 %s20, 2
      %s33 = sadd.s32 1, %s28
      %p34 = scmp.ge.s32.totalorder %s33, 1
      %s35 = scalar_select %p34, 0, %s33
      %s36 = sadd.s32 1, %s27
      %s37 = scalar_select %p34, %s36, %s27
      %p38 = scmp.ge.s32.totalorder %s37, 2
      %s39 = scalar_select %p38, 0, %s37
      %s40 = ssub.s32 %s27, %s39
      %s41 = ssub.s32 %s28, %s35
      %s42 = sor.u32 %s40, %s41
      %p43 = scmp.eq.s32.totalorder %s42, 0
      %s45 = sadd.s32 %s44, 1
      %s46 = scalar_select %p43, %s44, %s45
      %p49 = pneg %p43
      %p50 = scmp.eq.s32.totalorder %s20, 1
      %p51 = por %p49, %p50
      %p52 = scmp.ne.s32.totalorder %s44, %s47
      %p53 = scmp.eq.s32.totalorder %s20, 0
      %p54 = por %p52, %p53
      %p55 = scmp.ne.s32.totalorder %s44, %s47
      %p56 = scmp.eq.s32.totalorder %s25, 1
      %p57 = por %p55, %p56
      %p58 = scmp.ne.s32.totalorder %s47, %s48
      %p59 = scmp.eq.s32.totalorder %s25, 0
      %p60 = por %p58, %p59
      %p61 = scmp.ne.s32.totalorder %s47, %s48
      %p62 = scmp.eq.s32.totalorder %s26, 1
      %p63 = por %p61, %p62
      %p65 = scmp.ne.s32.totalorder %s48, %s64
      %p66 = scmp.eq.s32.totalorder %s26, 0
      %p67 = por %p65, %p66
      %s68 = ssub.s32 %s27, %s39
      %s69 = ssub.s32 %s28, %s35
      %s70 = sor.u32 %s68, %s69
      %p71 = scmp.eq.s32.totalorder %s70, 0
      %s73 = sadd.s32 %s72, 1
      %s74 = scalar_select %p71, %s72, %s73
      %p77 = pneg %p71
      %p78 = scmp.eq.s32.totalorder %s20, 1
      %p79 = por %p77, %p78
      %p80 = scmp.ne.s32.totalorder %s72, %s75
      %p81 = scmp.eq.s32.totalorder %s20, 0
      %p82 = por %p80, %p81
      %p83 = scmp.ne.s32.totalorder %s72, %s75
      %p84 = scmp.eq.s32.totalorder %s25, 1
      %p85 = por %p83, %p84
      %p86 = scmp.ne.s32.totalorder %s75, %s76
      %p87 = scmp.eq.s32.totalorder %s25, 0
      %p88 = por %p86, %p87
      %p89 = scmp.ne.s32.totalorder %s75, %s76
      %p90 = scmp.eq.s32.totalorder %s26, 1
      %p91 = por %p89, %p90
      %p93 = scmp.ne.s32.totalorder %s76, %s92
      %p94 = scmp.eq.s32.totalorder %s26, 0
      %p95 = por %p93, %p94
      %s97 = sadd.s32 %s96, 1
      %p100 = scmp.eq.s32.totalorder %s20, 1
      %p101 = scmp.ne.s32.totalorder %s96, %s98
      %p102 = scmp.eq.s32.totalorder %s20, 0
      %p103 = por %p101, %p102
      %p104 = scmp.ne.s32.totalorder %s96, %s98
      %p105 = scmp.eq.s32.totalorder %s25, 1
      %p106 = por %p104, %p105
      %p107 = scmp.ne.s32.totalorder %s98, %s99
      %p108 = scmp.eq.s32.totalorder %s25, 0
      %p109 = por %p107, %p108
      %p110 = scmp.ne.s32.totalorder %s98, %s99
      %p111 = scmp.eq.s32.totalorder %s26, 1
      %p112 = por %p110, %p111
      %p114 = scmp.ne.s32.totalorder %s99, %s113
      %p115 = scmp.eq.s32.totalorder %s26, 0
      %p116 = por %p114, %p115
      %s118 = sadd.s32 %s117, 1
      %p121 = scmp.eq.s32.totalorder %s20, 1
      %p122 = scmp.ne.s32.totalorder %s117, %s119
      %p123 = scmp.eq.s32.totalorder %s20, 0
      %p124 = por %p122, %p123
      %p125 = scmp.ne.s32.totalorder %s117, %s119
      %p126 = scmp.eq.s32.totalorder %s25, 1
      %p127 = por %p125, %p126
      %p128 = scmp.ne.s32.totalorder %s119, %s120
      %p129 = scmp.eq.s32.totalorder %s25, 0
      %p130 = por %p128, %p129
      %p131 = scmp.ne.s32.totalorder %s119, %s120
      %p132 = scmp.eq.s32.totalorder %s26, 1
      %p133 = por %p131, %p132
      %p135 = scmp.ne.s32.totalorder %s120, %s134
      %p136 = scmp.eq.s32.totalorder %s26, 0
      %p137 = por %p135, %p136
      %s139 = sadd.s32 %s138, 1
      %p142 = scmp.eq.s32.totalorder %s20, 1
      %p143 = scmp.ne.s32.totalorder %s138, %s140
      %p144 = scmp.eq.s32.totalorder %s20, 0
      %p145 = por %p143, %p144
      %p146 = scmp.ne.s32.totalorder %s138, %s140
      %p147 = scmp.eq.s32.totalorder %s25, 1
      %p148 = por %p146, %p147
      %p149 = scmp.ne.s32.totalorder %s140, %s141
      %p150 = scmp.eq.s32.totalorder %s25, 0
      %p151 = por %p149, %p150
      %p152 = scmp.ne.s32.totalorder %s140, %s141
      %p153 = scmp.eq.s32.totalorder %s26, 1
      %p154 = por %p152, %p153
      %p156 = scmp.ne.s32.totalorder %s141, %s155
      %p157 = scmp.eq.s32.totalorder %s26, 0
      %p158 = por %p156, %p157
      %s160 = sadd.s32 %s159, 1
      %p163 = scmp.eq.s32.totalorder %s20, 1
      %p164 = scmp.ne.s32.totalorder %s159, %s161
      %p165 = scmp.eq.s32.totalorder %s20, 0
      %p166 = por %p164, %p165
      %p167 = scmp.ne.s32.totalorder %s159, %s161
      %p168 = scmp.eq.s32.totalorder %s25, 1
      %p169 = por %p167, %p168
      %p170 = scmp.ne.s32.totalorder %s161, %s162
      %p171 = scmp.eq.s32.totalorder %s25, 0
      %p172 = por %p170, %p171
      %p173 = scmp.ne.s32.totalorder %s161, %s162
      %p174 = scmp.eq.s32.totalorder %s26, 1
      %p175 = por %p173, %p174
      %p177 = scmp.ne.s32.totalorder %s162, %s176
      %p178 = scmp.eq.s32.totalorder %s26, 0
      %p179 = por %p177, %p178
      %s180 = ssub.s32 %s27, %s39
      %p181 = scmp.eq.s32.totalorder %s180, 0
      %s183 = sadd.s32 %s182, 1
      %s184 = scalar_select %p181, %s182, %s183
      %p187 = pneg %p181
      %p188 = scmp.eq.s32.totalorder %s20, 1
      %p189 = por %p187, %p188
      %p190 = scmp.ne.s32.totalorder %s182, %s185
      %p191 = scmp.eq.s32.totalorder %s20, 0
      %p192 = por %p190, %p191
      %p193 = scmp.ne.s32.totalorder %s182, %s185
      %p194 = scmp.eq.s32.totalorder %s25, 1
      %p195 = por %p193, %p194
      %p196 = scmp.ne.s32.totalorder %s185, %s186
      %p197 = scmp.eq.s32.totalorder %s25, 0
      %p198 = por %p196, %p197
      %p199 = scmp.ne.s32.totalorder %s185, %s186
      %p200 = scmp.eq.s32.totalorder %s26, 1
      %p201 = por %p199, %p200
      %p203 = scmp.ne.s32.totalorder %s186, %s202
      %p204 = scmp.eq.s32.totalorder %s26, 0
      %p205 = por %p203, %p204
      %s206 = ssub.s32 %s27, %s39
      %p207 = scmp.eq.s32.totalorder %s206, 0
      %s209 = sadd.s32 %s208, 1
      %s210 = scalar_select %p207, %s208, %s209
      %p213 = pneg %p207
      %p214 = scmp.eq.s32.totalorder %s20, 1
      %p215 = por %p213, %p214
      %p216 = scmp.ne.s32.totalorder %s208, %s211
      %p217 = scmp.eq.s32.totalorder %s20, 0
      %p218 = por %p216, %p217
      %p219 = scmp.ne.s32.totalorder %s208, %s211
      %p220 = scmp.eq.s32.totalorder %s25, 1
      %p221 = por %p219, %p220
      %p222 = scmp.ne.s32.totalorder %s211, %s212
      %p223 = scmp.eq.s32.totalorder %s25, 0
      %p224 = por %p222, %p223
      %p225 = scmp.ne.s32.totalorder %s211, %s212
      %p226 = scmp.eq.s32.totalorder %s26, 1
      %p227 = por %p225, %p226
      %p229 = scmp.ne.s32.totalorder %s212, %s228
      %p230 = scmp.eq.s32.totalorder %s26, 0
      %p231 = por %p229, %p230
      %p232 = scmp.le.s32.totalorder 1, %s20
      %p233 = scmp.lt.s32.totalorder %s20, 3
      %p234 = pnand %p232, %p233
      %p235 = pneg %p234
      // Predicated region
      $region9: #{ffcse_forward.2} parent=5 // pred_check
        _
      $region10: #{ffcse_forward.2} parent=5 // pred_check_branch
        %237 = sbr.rel (%p234) target = $region12
      $region11: #{ffcse_forward.2} parent=5 // pred_region
        %s238 = ssub.s32 %s20, 1
        // Predicated region
        $region13: #{ffcse_forward.2} parent=11 // pred_check
          %p239 = pneg %p109
        $region14: #{ffcse_forward.2} parent=11 // pred_check_branch
          %241 = sbr.rel (%p239) target = $region16
        $region15: #{ffcse_forward.2} parent=11 // pred_region
          _
        $region16: #{ffcse_forward.2} parent=11 // pred_fallthru
          _
        // Predicated region
        $region17: #{ffcse_forward.2} parent=11 // pred_check
          %p242 = pneg %p130
        $region18: #{ffcse_forward.2} parent=11 // pred_check_branch
          %244 = sbr.rel (%p242) target = $region20
        $region19: #{ffcse_forward.2} parent=11 // pred_region
          _
        $region20: #{ffcse_forward.2} parent=11 // pred_fallthru
          _
        // Predicated region
        $region21: #{ffcse_forward.2} parent=11 // pred_check
          %p245 = pneg %p151
        $region22: #{ffcse_forward.2} parent=11 // pred_check_branch
          %247 = sbr.rel (%p245) target = $region24
        $region23: #{ffcse_forward.2} parent=11 // pred_region
          _
        $region24: #{ffcse_forward.2} parent=11 // pred_fallthru
          _
        // Predicated region
        $region25: #{ffcse_forward.2} parent=11 // pred_check
          %p248 = pneg %p172
        $region26: #{ffcse_forward.2} parent=11 // pred_check_branch
          %250 = sbr.rel (%p248) target = $region28
        $region27: #{ffcse_forward.2} parent=11 // pred_region
          _
        $region28: #{ffcse_forward.2} parent=11 // pred_fallthru
          _
      $region12: #{ffcse_forward.2} parent=5 // pred_fallthru
        _
      %p251 = scmp.lt.s32.totalorder %s20, 2
      // Predicated region
      $region29: #{ffcse_forward.2} parent=5 // pred_check
        %p252 = pneg %p251
      $region30: #{ffcse_forward.2} parent=5 // pred_check_branch
        %254 = sbr.rel (%p252) target = $region32
      $region31: #{ffcse_forward.2} parent=5 // pred_region
        // Predicated region
        $region33: #{ffcse_forward.2} parent=31 // pred_check
          %p255 = pneg %p54
        $region34: #{ffcse_forward.2} parent=31 // pred_check_branch
          %257 = sbr.rel (%p255) target = $region36
        $region35: #{ffcse_forward.2} parent=31 // pred_region
          %s258 = sand.u32 %s44, 1
          %s259 = scalar_lea.sflag [#allocation5], %s258
          %s260 = sand.u32 %s44, 1
          %s261 = smul.addr %s260, 256
          %s262 = scalar_lea.vmem [#allocation4], %s261
          %s263 = smul.u32 32, %s28
          %s265 = ssub.s32 4096, 4096
          %266 = vsyncadd %s259, %s265
          %s267 = smul.addr %s27, 32
          %s268 = sadd.s32 %s263, %s267
          %s269 = smul.addr %s268, 128
          %s270 = scalar_lea.hbm %s0, %s269
          %s271 = sshll.u32 %s262, 4
          %s272 = int_to_ptr.vmem [resolvable:$true] %s271
          %277 = dma.hbm_to_vmem [thread:$0]  %s270, 4096, %s272, %s259, 128, 128, 8
        $region36: #{ffcse_forward.2} parent=31 // pred_fallthru
          _
        // Predicated region
        $region37: #{ffcse_forward.2} parent=31 // pred_check
          %p278 = pneg %p82
        $region38: #{ffcse_forward.2} parent=31 // pred_check_branch
          %280 = sbr.rel (%p278) target = $region40
        $region39: #{ffcse_forward.2} parent=31 // pred_region
          %s281 = sand.u32 %s72, 1
          %s282 = scalar_lea.sflag [#allocation7], %s281
          %s283 = sand.u32 %s72, 1
          %s284 = smul.addr %s283, 256
          %s285 = scalar_lea.vmem [#allocation6], %s284
          %s286 = smul.u32 32, %s28
          %s288 = ssub.s32 4096, 4096
          %289 = vsyncadd %s282, %s288
          %s290 = smul.addr %s27, 32
          %s291 = sadd.s32 %s286, %s290
          %s292 = smul.addr %s291, 128
          %s293 = scalar_lea.hbm %s1, %s292
          %s294 = sshll.u32 %s285, 4
          %s295 = int_to_ptr.vmem [resolvable:$true] %s294
          %300 = dma.hbm_to_vmem [thread:$0]  %s293, 4096, %s295, %s282, 128, 128, 8
        $region40: #{ffcse_forward.2} parent=31 // pred_fallthru
          _
      $region32: #{ffcse_forward.2} parent=5 // pred_fallthru
        _
      %p301 = scmp.le.s32.totalorder 1, %s20
      %p302 = scmp.lt.s32.totalorder %s20, 3
      %p303 = pnand %p301, %p302
      %p304 = pneg %p303
      // Predicated region
      $region41: #{ffcse_forward.2} parent=5 // pred_check
        _
      $region42: #{ffcse_forward.2} parent=5 // pred_check_branch
        %306 = sbr.rel (%p303) target = $region44
      $region43: #{ffcse_forward.2} parent=5 // pred_region
        %s307 = ssub.s32 %s20, 1
        %s308 = sand.u32 %s47, 1
        %s309 = scalar_lea.sflag [#allocation5], %s308
        %s310 = sand.u32 %s47, 1
        %s311 = smul.addr %s310, 256
        %s312 = scalar_lea.vmem [#allocation4], %s311
        // Predicated region
        $region45: #{ffcse_forward.2} parent=43 // pred_check
          %p313 = pneg %p60
        $region46: #{ffcse_forward.2} parent=43 // pred_check_branch
          %315 = sbr.rel (%p313) target = $region48
        $region47: #{ffcse_forward.2} parent=43 // pred_region
          %316 = dma.done %s309, 4096
        $region48: #{ffcse_forward.2} parent=43 // pred_fallthru
          _
        %s317 = sand.u32 %s75, 1
        %s318 = scalar_lea.sflag [#allocation7], %s317
        %s319 = sand.u32 %s75, 1
        %s320 = smul.addr %s319, 256
        %s321 = scalar_lea.vmem [#allocation6], %s320
        // Predicated region
        $region49: #{ffcse_forward.2} parent=43 // pred_check
          %p322 = pneg %p88
        $region50: #{ffcse_forward.2} parent=43 // pred_check_branch
          %324 = sbr.rel (%p322) target = $region52
        $region51: #{ffcse_forward.2} parent=43 // pred_region
          %325 = dma.done %s318, 4096
        $region52: #{ffcse_forward.2} parent=43 // pred_fallthru
          _
        %s326 = sand.u32 %s47, 1
        %s327 = scalar_lea.sflag [#allocation5], %s326
        %s328 = sand.u32 %s47, 1
        %s329 = smul.addr %s328, 256
        %s330 = scalar_lea.vmem [#allocation4], %s329
        %p331 = pneg %p60
        %p332 = pneg %p57
        %s333 = sand.u32 %s75, 1
        %s334 = scalar_lea.sflag [#allocation7], %s333
        %s335 = sand.u32 %s75, 1
        %s336 = smul.addr %s335, 256
        %s337 = scalar_lea.vmem [#allocation6], %s336
        %p338 = pneg %p88
        %p339 = pneg %p85
        %p340 = pneg %p109
        %p341 = pneg %p106
        %p342 = pneg %p130
        %p343 = pneg %p127
        %p344 = pneg %p151
        %p345 = pneg %p148
        %p346 = pneg %p172
        %p347 = pneg %p169
        %p348 = pneg %p198
        %p349 = pneg %p195
        %p350 = scmp.lt.s32.totalorder %s29, 1
        %s351 = scalar_select %p350, %s29, 1
        %s352 = scalar_lea.vmem %s6, %s351
        %p353 = pneg %p224
        %p354 = pneg %p221
        %p355 = scmp.lt.s32.totalorder %s29, 1
        %s356 = scalar_select %p355, %s29, 1
        %s357 = scalar_lea.vmem %s7, %s356
        %s358 = smul.u32 32, %s30
        %s359 = smul.u32 32, %s30
        %p360 = scmp.lt.s32.totalorder %s29, 1
        %s361 = scalar_select %p360, %s29, 1
        %s362 = scalar_lea.vmem %s6, %s361
        %p363 = scmp.lt.s32.totalorder %s29, 1
        %s364 = scalar_select %p363, %s29, 1
        %s365 = scalar_lea.vmem %s7, %s364
        %p366 = scmp.eq.s32.totalorder %s30, 0
        // Predicated region
        $region53: #{ffcse_forward.2} parent=43 // pred_check
          %p367 = pneg %p366
        $region54: #{ffcse_forward.2} parent=43 // pred_check_branch
          %369 = sbr.rel (%p367) target = $region56
        $region55: #{ffcse_forward.2} parent=43 // pred_region
          %370 = vst [vmem:[#allocation2] sm:$0x1] 0.0
          %371 = vst [vmem:[#allocation3] sm:$0x1] 0.0
        $region56: #{ffcse_forward.2} parent=43 // pred_fallthru
          _
        %v372 = vld [vmem:[#allocation2] sm:$0x1]
        %v373 = vld [vmem:[%s312] sm:$0xff]
        %v374 = vld [vmem:[%s312 + $0x8] sm:$0xff]
        %v375 = vld [vmem:[%s312 + $0x10] sm:$0xff]
        %v376 = vld [vmem:[%s312 + $0x18] sm:$0xff]
        %v377 = vld [vmem:[%s312 + $0x20] sm:$0xff]
        %v378 = vld [vmem:[%s312 + $0x28] sm:$0xff]
        %v379 = vld [vmem:[%s312 + $0x30] sm:$0xff]
        %v380 = vld [vmem:[%s312 + $0x38] sm:$0xff]
        %v381 = vld [vmem:[%s312 + $0x40] sm:$0xff]
        %v382 = vld [vmem:[%s312 + $0x48] sm:$0xff]
        %v383 = vld [vmem:[%s312 + $0x50] sm:$0xff]
        %v384 = vld [vmem:[%s312 + $0x58] sm:$0xff]
        %v385 = vld [vmem:[%s312 + $0x60] sm:$0xff]
        %v386 = vld [vmem:[%s312 + $0x68] sm:$0xff]
        %v387 = vld [vmem:[%s312 + $0x70] sm:$0xff]
        %v388 = vld [vmem:[%s312 + $0x78] sm:$0xff]
        %v389 = vld [vmem:[%s312 + $0x80] sm:$0xff]
        %v390 = vld [vmem:[%s312 + $0x88] sm:$0xff]
        %v391 = vld [vmem:[%s312 + $0x90] sm:$0xff]
        %v392 = vld [vmem:[%s312 + $0x98] sm:$0xff]
        %v393 = vld [vmem:[%s312 + $0xa0] sm:$0xff]
        %v394 = vld [vmem:[%s312 + $0xa8] sm:$0xff]
        %v395 = vld [vmem:[%s312 + $0xb0] sm:$0xff]
        %v396 = vld [vmem:[%s312 + $0xb8] sm:$0xff]
        %v397 = vld [vmem:[%s312 + $0xc0] sm:$0xff]
        %v398 = vld [vmem:[%s312 + $0xc8] sm:$0xff]
        %v399 = vld [vmem:[%s312 + $0xd0] sm:$0xff]
        %v400 = vld [vmem:[%s312 + $0xd8] sm:$0xff]
        %v401 = vld [vmem:[%s312 + $0xe0] sm:$0xff]
        %v402 = vld [vmem:[%s312 + $0xe8] sm:$0xff]
        %v403 = vld [vmem:[%s312 + $0xf0] sm:$0xff]
        %v404 = vld [vmem:[%s312 + $0xf8] sm:$0xff]
        %v405 = vadd.f32 %v373, %v374
        %v406 = vadd.f32 %v405, %v375
        %v407 = vadd.f32 %v406, %v376
        %v408 = vadd.f32 %v407, %v377
        %v409 = vadd.f32 %v408, %v378
        %v410 = vadd.f32 %v409, %v379
        %v411 = vadd.f32 %v410, %v380
        %v412 = vadd.f32 %v411, %v381
        %v413 = vadd.f32 %v412, %v382
        %v414 = vadd.f32 %v413, %v383
        %v415 = vadd.f32 %v414, %v384
        %v416 = vadd.f32 %v415, %v385
        %v417 = vadd.f32 %v416, %v386
        %v418 = vadd.f32 %v417, %v387
        %v419 = vadd.f32 %v418, %v388
        %v420 = vadd.f32 %v419, %v389
        %v421 = vadd.f32 %v420, %v390
        %v422 = vadd.f32 %v421, %v391
        %v423 = vadd.f32 %v422, %v392
        %v424 = vadd.f32 %v423, %v393
        %v425 = vadd.f32 %v424, %v394
        %v426 = vadd.f32 %v425, %v395
        %v427 = vadd.f32 %v426, %v396
        %v428 = vadd.f32 %v427, %v397
        %v429 = vadd.f32 %v428, %v398
        %v430 = vadd.f32 %v429, %v399
        %v431 = vadd.f32 %v430, %v400
        %v432 = vadd.f32 %v431, %v401
        %v433 = vadd.f32 %v432, %v402
        %v434 = vadd.f32 %v433, %v403
        %v435 = vadd.f32 %v434, %v404
        %v436 = vrot.slane %v435, 4
        %v437 = vadd.f32 %v435, %v436
        %v438 = vrot.slane %v437, 2
        %v439 = vadd.f32 %v437, %v438
        %v440 = vrot.slane %v439, 1
        %v441 = vadd.f32 %v439, %v440
        %v442 = vadd.f32 %v372, %v441
        %443 = vst [vmem:[#allocation2] sm:$0x1] %v442
        %v444 = vld [vmem:[#allocation3] sm:$0x1]
        %v445 = vld [vmem:[%s321] sm:$0xff]
        %v446 = vld [vmem:[%s321 + $0x8] sm:$0xff]
        %v447 = vld [vmem:[%s321 + $0x10] sm:$0xff]
        %v448 = vld [vmem:[%s321 + $0x18] sm:$0xff]
        %v449 = vld [vmem:[%s321 + $0x20] sm:$0xff]
        %v450 = vld [vmem:[%s321 + $0x28] sm:$0xff]
        %v451 = vld [vmem:[%s321 + $0x30] sm:$0xff]
        %v452 = vld [vmem:[%s321 + $0x38] sm:$0xff]
        %v453 = vld [vmem:[%s321 + $0x40] sm:$0xff]
        %v454 = vld [vmem:[%s321 + $0x48] sm:$0xff]
        %v455 = vld [vmem:[%s321 + $0x50] sm:$0xff]
        %v456 = vld [vmem:[%s321 + $0x58] sm:$0xff]
        %v457 = vld [vmem:[%s321 + $0x60] sm:$0xff]
        %v458 = vld [vmem:[%s321 + $0x68] sm:$0xff]
        %v459 = vld [vmem:[%s321 + $0x70] sm:$0xff]
        %v460 = vld [vmem:[%s321 + $0x78] sm:$0xff]
        %v461 = vld [vmem:[%s321 + $0x80] sm:$0xff]
        %v462 = vld [vmem:[%s321 + $0x88] sm:$0xff]
        %v463 = vld [vmem:[%s321 + $0x90] sm:$0xff]
        %v464 = vld [vmem:[%s321 + $0x98] sm:$0xff]
        %v465 = vld [vmem:[%s321 + $0xa0] sm:$0xff]
        %v466 = vld [vmem:[%s321 + $0xa8] sm:$0xff]
        %v467 = vld [vmem:[%s321 + $0xb0] sm:$0xff]
        %v468 = vld [vmem:[%s321 + $0xb8] sm:$0xff]
        %v469 = vld [vmem:[%s321 + $0xc0] sm:$0xff]
        %v470 = vld [vmem:[%s321 + $0xc8] sm:$0xff]
        %v471 = vld [vmem:[%s321 + $0xd0] sm:$0xff]
        %v472 = vld [vmem:[%s321 + $0xd8] sm:$0xff]
        %v473 = vld [vmem:[%s321 + $0xe0] sm:$0xff]
        %v474 = vld [vmem:[%s321 + $0xe8] sm:$0xff]
        %v475 = vld [vmem:[%s321 + $0xf0] sm:$0xff]
        %v476 = vld [vmem:[%s321 + $0xf8] sm:$0xff]
        %v477 = vadd.f32 %v445, %v446
        %v478 = vadd.f32 %v477, %v447
        %v479 = vadd.f32 %v478, %v448
        %v480 = vadd.f32 %v479, %v449
        %v481 = vadd.f32 %v480, %v450
        %v482 = vadd.f32 %v481, %v451
        %v483 = vadd.f32 %v482, %v452
        %v484 = vadd.f32 %v483, %v453
        %v485 = vadd.f32 %v484, %v454
        %v486 = vadd.f32 %v485, %v455
        %v487 = vadd.f32 %v486, %v456
        %v488 = vadd.f32 %v487, %v457
        %v489 = vadd.f32 %v488, %v458
        %v490 = vadd.f32 %v489, %v459
        %v491 = vadd.f32 %v490, %v460
        %v492 = vadd.f32 %v491, %v461
        %v493 = vadd.f32 %v492, %v462
        %v494 = vadd.f32 %v493, %v463
        %v495 = vadd.f32 %v494, %v464
        %v496 = vadd.f32 %v495, %v465
        %v497 = vadd.f32 %v496, %v466
        %v498 = vadd.f32 %v497, %v467
        %v499 = vadd.f32 %v498, %v468
        %v500 = vadd.f32 %v499, %v469
        %v501 = vadd.f32 %v500, %v470
        %v502 = vadd.f32 %v501, %v471
        %v503 = vadd.f32 %v502, %v472
        %v504 = vadd.f32 %v503, %v473
        %v505 = vadd.f32 %v504, %v474
        %v506 = vadd.f32 %v505, %v475
        %v507 = vadd.f32 %v506, %v476
        %v508 = vrot.slane %v507, 4
        %v509 = vadd.f32 %v507, %v508
        %v510 = vrot.slane %v509, 2
        %v511 = vadd.f32 %v509, %v510
        %v512 = vrot.slane %v511, 1
        %v513 = vadd.f32 %v511, %v512
        %v514 = vadd.f32 %v444, %v513
        %515 = vst [vmem:[#allocation3] sm:$0x1] %v514
        // Predicated region
        $region57: #{ffcse_forward.2} parent=43 // pred_check
          %p516 = pneg %p366
        $region58: #{ffcse_forward.2} parent=43 // pred_check_branch
          %518 = sbr.rel (%p516) target = $region60
        $region59: #{ffcse_forward.2} parent=43 // pred_region
          %v519 = vld [vmem:[#allocation2] sm:$0x1]
          %v520 = vld [vmem:[#allocation3] sm:$0x1]
          %v521 = vmul.f32 %v519, 0.00390625
          %v522 = vmul.f32 %v520, 0.00390625
          %v523 = vld [vmem:[%s2] sm:$0xff]
          %v524 = vld [vmem:[%s2 + $0x8] sm:$0xff]
          %v525 = vld [vmem:[%s2 + $0x10] sm:$0xff]
          %v526 = vld [vmem:[%s2 + $0x18] sm:$0xff]
          %v527 = vld [vmem:[%s2 + $0x20] sm:$0xff]
          %v528 = vld [vmem:[%s2 + $0x28] sm:$0xff]
          %v529 = vld [vmem:[%s2 + $0x30] sm:$0xff]
          %v530 = vld [vmem:[%s2 + $0x38] sm:$0xff]
          %v531 = vld [vmem:[%s2 + $0x40] sm:$0xff]
          %v532 = vld [vmem:[%s2 + $0x48] sm:$0xff]
          %v533 = vld [vmem:[%s2 + $0x50] sm:$0xff]
          %v534 = vld [vmem:[%s2 + $0x58] sm:$0xff]
          %v535 = vld [vmem:[%s2 + $0x60] sm:$0xff]
          %v536 = vld [vmem:[%s2 + $0x68] sm:$0xff]
          %v537 = vld [vmem:[%s2 + $0x70] sm:$0xff]
          %v538 = vld [vmem:[%s2 + $0x78] sm:$0xff]
          %v539 = vld [vmem:[%s2 + $0x80] sm:$0xff]
          %v540 = vld [vmem:[%s2 + $0x88] sm:$0xff]
          %v541 = vld [vmem:[%s2 + $0x90] sm:$0xff]
          %v542 = vld [vmem:[%s2 + $0x98] sm:$0xff]
          %v543 = vld [vmem:[%s2 + $0xa0] sm:$0xff]
          %v544 = vld [vmem:[%s2 + $0xa8] sm:$0xff]
          %v545 = vld [vmem:[%s2 + $0xb0] sm:$0xff]
          %v546 = vld [vmem:[%s2 + $0xb8] sm:$0xff]
          %v547 = vld [vmem:[%s2 + $0xc0] sm:$0xff]
          %v548 = vld [vmem:[%s2 + $0xc8] sm:$0xff]
          %v549 = vld [vmem:[%s2 + $0xd0] sm:$0xff]
          %v550 = vld [vmem:[%s2 + $0xd8] sm:$0xff]
          %v551 = vld [vmem:[%s2 + $0xe0] sm:$0xff]
          %v552 = vld [vmem:[%s2 + $0xe8] sm:$0xff]
          %v553 = vld [vmem:[%s2 + $0xf0] sm:$0xff]
          %v554 = vld [vmem:[%s2 + $0xf8] sm:$0xff]
          %v555 = vld [vmem:[%s3] sm:$0x1]
          %556 = vmatprep.subr.mxu0 0.0
          %557 = vmatpush1.msra.mxu0 %v523
          %558 = vmatprep.subr.mxu0 0.0
          %559 = vmatpush1.msra.mxu0 %v524
          %560 = vmatprep.subr.mxu0 0.0
          %561 = vmatpush1.msra.mxu0 %v525
          %562 = vmatprep.subr.mxu0 0.0
          %563 = vmatpush1.msra.mxu0 %v526
          %564 = vmatprep.subr.mxu0 0.0
          %565 = vmatpush1.msra.mxu0 %v527
          %566 = vmatprep.subr.mxu0 0.0
          %567 = vmatpush1.msra.mxu0 %v528
          %568 = vmatprep.subr.mxu0 0.0
          %569 = vmatpush1.msra.mxu0 %v529
          %570 = vmatprep.subr.mxu0 0.0
          %571 = vmatpush1.msra.mxu0 %v530
          %572 = vmatprep.subr.mxu0 0.0
          %573 = vmatpush1.msra.mxu0 %v531
          %574 = vmatprep.subr.mxu0 0.0
          %575 = vmatpush1.msra.mxu0 %v532
          %576 = vmatprep.subr.mxu0 0.0
          %577 = vmatpush1.msra.mxu0 %v533
          %578 = vmatprep.subr.mxu0 0.0
          %579 = vmatpush1.msra.mxu0 %v534
          %580 = vmatprep.subr.mxu0 0.0
          %581 = vmatpush1.msra.mxu0 %v535
          %582 = vmatprep.subr.mxu0 0.0
          %583 = vmatpush1.msra.mxu0 %v536
          %584 = vmatprep.subr.mxu0 0.0
          %585 = vmatpush1.msra.mxu0 %v537
          %586 = vmatprep.subr.mxu0 0.0
          %587 = vmatpush1.msra.mxu0 %v538
          %588 = vmatprep.subr.mxu0 0.0
          %589 = vmatpush1.msra.mxu0 %v539
          %590 = vmatprep.subr.mxu0 0.0
          %591 = vmatpush1.msra.mxu0 %v540
          %592 = vmatprep.subr.mxu0 0.0
          %593 = vmatpush1.msra.mxu0 %v541
          %594 = vmatprep.subr.mxu0 0.0
          %595 = vmatpush1.msra.mxu0 %v542
          %596 = vmatprep.subr.mxu0 0.0
          %597 = vmatpush1.msra.mxu0 %v543
          %598 = vmatprep.subr.mxu0 0.0
          %599 = vmatpush1.msra.mxu0 %v544
          %600 = vmatprep.subr.mxu0 0.0
          %601 = vmatpush1.msra.mxu0 %v545
          %602 = vmatprep.subr.mxu0 0.0
          %603 = vmatpush1.msra.mxu0 %v546
          %604 = vmatprep.subr.mxu0 0.0
          %605 = vmatpush1.msra.mxu0 %v547
          %606 = vmatprep.subr.mxu0 0.0
          %607 = vmatpush1.msra.mxu0 %v548
          %608 = vmatprep.subr.mxu0 0.0
          %609 = vmatpush1.msra.mxu0 %v549
          %610 = vmatprep.subr.mxu0 0.0
          %611 = vmatpush1.msra.mxu0 %v550
          %612 = vmatprep.subr.mxu0 0.0
          %613 = vmatpush1.msra.mxu0 %v551
          %614 = vmatprep.subr.mxu0 0.0
          %615 = vmatpush1.msra.mxu0 %v552
          %616 = vmatprep.subr.mxu0 0.0
          %617 = vmatpush1.msra.mxu0 %v553
          %618 = vmatprep.subr.mxu0 0.0
          %619 = vmatpush1.msra.mxu0 %v554
          %620 = vmatprep.mubr.f32.mxu0 %v522
          %621 = vmatmul.mubr.f32.gmra.mrb[0].mxu0 %v521
          %v622 = vpop.f32.mrb[0].mxu0
          %v623 = vadd.f32 %v555, %v622
          %v624 = vpop.f32.mrb[0].mxu0
          %625 = vdwg.mxu0
          %v626 = vmax.f32 %v623, 0.0
          %v627 = vld [vmem:[%s4] sm:$0xff]
          %v628 = vld [vmem:[%s4 + $0x8] sm:$0xff]
          %v629 = vld [vmem:[%s4 + $0x10] sm:$0xff]
          %v630 = vld [vmem:[%s4 + $0x18] sm:$0xff]
          %v631 = vld [vmem:[%s5] sm:$0x3]
          %v633 = vlaneseq
          %v634 = vshrl.u32 %v633, 7
          %v635 = vsub.s32 0, %v634
          %v636 = vrot.slane %v631, %v635
          %v637 = vlaneseq
          %v638 = vshrl.u32 %v637, 7
          %v639 = vsub.s32 1, %v638
          %v640 = vrot.slane %v631, %v639
          %vm643 = vcmask 130048
          %v645 = vsel %vm643, %v626, 0
          %647 = vmatprep.subr.mxu0 %v628
          %648 = vmatpush1.msra.mxu0 %v627
          %649 = vmatprep.subr.mxu0 %v630
          %650 = vmatpush1.msra.mxu0 %v629
          %651 = vmatprep.subr.mxu0 0.0
          %652 = vmatpush1.msra.mxu0 0.0
          %653 = vmatprep.subr.mxu0 0.0
          %654 = vmatpush1.msra.mxu0 0.0
          %655 = vmatprep.subr.mxu0 0.0
          %656 = vmatpush1.msra.mxu0 0.0
          %657 = vmatprep.subr.mxu0 0.0
          %658 = vmatpush1.msra.mxu0 0.0
          %659 = vmatprep.subr.mxu0 0.0
          %660 = vmatpush1.msra.mxu0 0.0
          %661 = vmatprep.subr.mxu0 0.0
          %662 = vmatpush1.msra.mxu0 0.0
          %663 = vmatprep.subr.mxu0 0.0
          %664 = vmatpush1.msra.mxu0 0.0
          %665 = vmatprep.subr.mxu0 0.0
          %666 = vmatpush1.msra.mxu0 0.0
          %667 = vmatprep.subr.mxu0 0.0
          %668 = vmatpush1.msra.mxu0 0.0
          %669 = vmatprep.subr.mxu0 0.0
          %670 = vmatpush1.msra.mxu0 0.0
          %671 = vmatprep.subr.mxu0 0.0
          %672 = vmatpush1.msra.mxu0 0.0
          %673 = vmatprep.subr.mxu0 0.0
          %674 = vmatpush1.msra.mxu0 0.0
          %675 = vmatprep.subr.mxu0 0.0
          %676 = vmatpush1.msra.mxu0 0.0
          %677 = vmatprep.subr.mxu0 0.0
          %678 = vmatpush1.msra.mxu0 0.0
          %679 = vmatprep.subr.mxu0 0.0
          %680 = vmatpush1.msra.mxu0 0.0
          %681 = vmatprep.subr.mxu0 0.0
          %682 = vmatpush1.msra.mxu0 0.0
          %683 = vmatprep.subr.mxu0 0.0
          %684 = vmatpush1.msra.mxu0 0.0
          %685 = vmatprep.subr.mxu0 0.0
          %686 = vmatpush1.msra.mxu0 0.0
          %687 = vmatprep.subr.mxu0 0.0
          %688 = vmatpush1.msra.mxu0 0.0
          %689 = vmatprep.subr.mxu0 0.0
          %690 = vmatpush1.msra.mxu0 0.0
          %691 = vmatprep.subr.mxu0 0.0
          %692 = vmatpush1.msra.mxu0 0.0
          %693 = vmatprep.subr.mxu0 0.0
          %694 = vmatpush1.msra.mxu0 0.0
          %695 = vmatprep.subr.mxu0 0.0
          %696 = vmatpush1.msra.mxu0 0.0
          %697 = vmatprep.subr.mxu0 0.0
          %698 = vmatpush1.msra.mxu0 0.0
          %699 = vmatprep.subr.mxu0 0.0
          %700 = vmatpush1.msra.mxu0 0.0
          %701 = vmatprep.subr.mxu0 0.0
          %702 = vmatpush1.msra.mxu0 0.0
          %703 = vmatprep.subr.mxu0 0.0
          %704 = vmatpush1.msra.mxu0 0.0
          %705 = vmatprep.subr.mxu0 0.0
          %706 = vmatpush1.msra.mxu0 0.0
          %707 = vmatprep.subr.mxu0 0.0
          %708 = vmatpush1.msra.mxu0 0.0
          %709 = vmatprep.subr.mxu0 0.0
          %710 = vmatpush1.msra.mxu0 0.0
          %711 = vmatprep.mubr.f32.mxu0 0.0
          %712 = vmatmul.mubr.f32.gmra.mrb[0].mxu0 %v645
          %v713 = vpop.f32.mrb[0].mxu0
          %v714 = vadd.f32 %v636, %v713
          %v715 = vpop.f32.mrb[0].mxu0
          %v716 = vadd.f32 %v640, %v715
          %717 = vdwg.mxu0
          %v718 = vxor.u32 %v714, 2147483648
          %v719 = vxor.u32 %v716, 2147483648
          %v720 = vmul.f32 %v718, 1.442695
          %v721 = vpow.pop %v720
          %v722 = vmul.f32 %v719, 1.442695
          %v723 = vpow.pop %v722
          %v724 = vadd.f32 %v721, 1.0
          %v725 = vadd.f32 %v723, 1.0
          %v726 = vrcp.pop %v724
          %v727 = vmul.f32 1.0, %v726
          %v728 = vrcp.pop %v725
          %v729 = vmul.f32 1.0, %v728
          %730 = vst [vmem:[%s362] sm:$0x1] %v727
          %731 = vst [vmem:[%s365] sm:$0x1] %v729
        $region60: #{ffcse_forward.2} parent=43 // pred_fallthru
          _
        %p732 = scmp.lt.s32.totalorder %s29, 1
        %s733 = scalar_select %p732, %s29, 1
        %s734 = scalar_lea.vmem %s6, %s733
        %p735 = scmp.lt.s32.totalorder %s29, 1
        %s736 = scalar_select %p735, %s29, 1
        %s737 = scalar_lea.vmem %s7, %s736
        // Predicated region
        $region61: #{ffcse_forward.2} parent=43 // pred_check
          %p738 = pneg %p195
        $region62: #{ffcse_forward.2} parent=43 // pred_check_branch
          %740 = sbr.rel (%p738) target = $region64
        $region63: #{ffcse_forward.2} parent=43 // pred_region
          _
        $region64: #{ffcse_forward.2} parent=43 // pred_fallthru
          _
        // Predicated region
        $region65: #{ffcse_forward.2} parent=43 // pred_check
          %p741 = pneg %p221
        $region66: #{ffcse_forward.2} parent=43 // pred_check_branch
          %743 = sbr.rel (%p741) target = $region68
        $region67: #{ffcse_forward.2} parent=43 // pred_region
          _
        $region68: #{ffcse_forward.2} parent=43 // pred_fallthru
          _
      $region44: #{ffcse_forward.2} parent=5 // pred_fallthru
        _
      %p744 = scmp.le.s32.totalorder 2, %s20
      // Predicated region
      $region69: #{ffcse_forward.2} parent=5 // pred_check
        %p745 = pneg %p744
      $region70: #{ffcse_forward.2} parent=5 // pred_check_branch
        %747 = sbr.rel (%p745) target = $region72
      $region71: #{ffcse_forward.2} parent=5 // pred_region
        %s748 = ssub.s32 %s20, 2
        // Predicated region
        $region73: #{ffcse_forward.2} parent=71 // pred_check
          %p749 = pneg %p201
        $region74: #{ffcse_forward.2} parent=71 // pred_check_branch
          %751 = sbr.rel (%p749) target = $region76
        $region75: #{ffcse_forward.2} parent=71 // pred_region
          %p752 = scmp.lt.s32.totalorder %s31, 1
          %s753 = scalar_select %p752, %s31, 1
          %s754 = scalar_lea.vmem %s6, %s753
        $region76: #{ffcse_forward.2} parent=71 // pred_fallthru
          _
        // Predicated region
        $region77: #{ffcse_forward.2} parent=71 // pred_check
          %p755 = pneg %p227
        $region78: #{ffcse_forward.2} parent=71 // pred_check_branch
          %757 = sbr.rel (%p755) target = $region80
        $region79: #{ffcse_forward.2} parent=71 // pred_region
          %p758 = scmp.lt.s32.totalorder %s31, 1
          %s759 = scalar_select %p758, %s31, 1
          %s760 = scalar_lea.vmem %s7, %s759
        $region80: #{ffcse_forward.2} parent=71 // pred_fallthru
          _
      $region72: #{ffcse_forward.2} parent=5 // pred_fallthru
        _
    $region6: #{ffcse_forward.2} parent=1 // loop_footer
      %s24 = sadd.s32 1, %s20
    $region7: #{ffcse_forward.2} parent=1 // loop_footer_branch
      %19 = sbr.rel target = $region3
    $region8: #{ffcse_forward.2} parent=1 // loop_exit
      _
    %761 = vsyncpa [#allocation5], 1
    %s762 = scalar_lea.sflag [#allocation5], 1
    %763 = vsyncpa %s762, 1
    %764 = vsyncpa [#allocation7], 1
    %s765 = scalar_lea.sflag [#allocation7], 1
    %766 = vsyncpa %s765, 1

</llo_original>
